<compile_context>
chip_gen: v5e
topology: v5e:2x2
jax: 0.10.0
libtpu: 0.0.40
codegen_flags: <defaults>
</compile_context>

<pallas_src>
import functools
import math

import jax
import jax.numpy as jnp
from jax.experimental import pallas as pl
from jax.experimental.pallas import tpu as pltpu


# ----------------------------------------------------------------------------
# Fused kernel: layer-0 projection + wavefronted multi-layer LSTM recurrence
# + classifier + sigmoid.  Gate columns pre-permuted to [i, f, o, g].
# ----------------------------------------------------------------------------
def _fused_lstm_cls_kernel(*refs, num_layers, hidden_size, batch, seq_len):
    L, H, B = num_layers, hidden_size, batch

    idx = 0
    x_ref = refs[idx]; idx += 1                               # (S*B, D_pad) time-major
    wih0_ref = refs[idx]; idx += 1                            # (D_pad, 4H)
    b0_ref = refs[idx]; idx += 1                              # (1, 4H)
    whh0_ref = refs[idx]; idx += 1                            # (H, 4H)
    wcat_refs = refs[idx:idx + L - 1]; idx += L - 1           # (2H, 4H) per upper layer
    bup_refs = refs[idx:idx + L - 1]; idx += L - 1            # (1, 4H) per upper layer
    h0_ref = refs[idx]; idx += 1                              # (L*B, H)
    c0_ref = refs[idx]; idx += 1                              # (L*B, H)
    clsw_ref = refs[idx]; idx += 1                            # (H, O)
    clsb_ref = refs[idx]; idx += 1                            # (1, O)
    out_ref = refs[idx]                                       # (B, O)

    # Layer-0 input projection for ALL timesteps as one matmul (off the serial
    # h/c dependency chain); includes the combined b_ih + b_hh bias.
    gx0 = (jnp.dot(x_ref[...], wih0_ref[...],
                   preferred_element_type=jnp.float32) + b0_ref[...])   # (S*B, 4H)

    whh0 = whh0_ref[...]
    wcat = [r[...] for r in wcat_refs]
    bup = [r[...] for r in bup_refs]

    h = [h0_ref[pl.ds(l * B, B), :] for l in range(L)]
    c = [c0_ref[pl.ds(l * B, B), :] for l in range(L)]
    below = [None] * L   # below[l]: layer (l-1)'s h at the step layer l consumes next

    def cell(gates, c_prev):
        # gate layout (permuted at prep time): [ i | f | o | g ]
        sig = jax.nn.sigmoid(gates[:, : 3 * H])      # one contiguous 3H EUP chain
        i_g = sig[:, 0 * H:1 * H]
        f_g = sig[:, 1 * H:2 * H]
        o_g = sig[:, 2 * H:3 * H]
        g_g = jnp.tanh(gates[:, 3 * H:4 * H])
        c_new = f_g * c_prev + i_g * g_g
        h_new = o_g * jnp.tanh(c_new)
        return h_new, c_new

    # Layer-diagonal wavefront: at tick k, layer l processes timestep t = k - l.
    # Every computation at tick k only reads state produced at tick k-1, so the
    # per-tick matmuls are independent and issue back-to-back.
    # TODO(synk): at production seq_len, replace the full unroll with a
    # time-chunk "arbitrary" grid axis + VMEM-scratch h/c carries (pl.when
    # init/finalize), bf16 MXU operands on v6e/v7x, and a "parallel" batch
    # axis so v7x's two TensorCores each take half the batch.
    for k in range(seq_len + L - 1):
        new_h, new_c, new_below = list(h), list(c), list(below)
        for l in range(L):
            t = k - l
            if 0 <= t < seq_len:
                if l == 0:
                    gates = gx0[t * B:(t + 1) * B, :] + jnp.dot(
                        h[0], whh0, preferred_element_type=jnp.float32)
                else:
                    lhs = jnp.concatenate([below[l], h[l]], axis=1)      # (B, 2H)
                    gates = jnp.dot(lhs, wcat[l - 1],
                                    preferred_element_type=jnp.float32) + bup[l - 1]
                h_new, c_new = cell(gates, c[l])
                new_h[l], new_c[l] = h_new, c_new
                if l + 1 < L:
                    new_below[l + 1] = h_new
        h, c, below = new_h, new_c, new_below

    # Classifier + sigmoid on the top layer's last-timestep hidden state.
    logits = jnp.dot(h[L - 1], clsw_ref[...],
                     preferred_element_type=jnp.float32) + clsb_ref[...]
    out_ref[...] = jax.nn.sigmoid(logits).astype(out_ref.dtype)


# ----------------------------------------------------------------------------
# Wrapper: layout prep (time-major flat x, flat h0/c0) + single fused call.
# ----------------------------------------------------------------------------
def multilabel_lstm_forward(x, prepped, h0_all, c0_all, num_layers, hidden_size):
    """x: (batch, seq, input_size) batch-first.  Returns (batch, output_size)."""
    batch, seq_len, input_size = x.shape
    H, L = hidden_size, num_layers
    g4 = 4 * H
    d_pad = prepped["d_pad"]
    out_size = prepped["cls_w_t"].shape[-1]

    # Time-major flat (S*B, D_pad): lane-dense, no per-timestep 3-D slabs.
    x_t = jnp.transpose(x, (1, 0, 2)).reshape(seq_len * batch, input_size)
    if d_pad > input_size:
        x_t = jnp.pad(x_t, ((0, 0), (0, d_pad - input_size)))
    h0_flat = h0_all.reshape(L * batch, H)
    c0_flat = c0_all.reshape(L * batch, H)

    inputs = [x_t, prepped["w_ih0_t"], prepped["b0"], prepped["w_hh0_t"]]
    in_specs = [
        pl.BlockSpec((seq_len * batch, d_pad), lambda i: (0, 0)),
        pl.BlockSpec((d_pad, g4), lambda i: (0, 0)),
        pl.BlockSpec((1, g4), lambda i: (0, 0)),
        pl.BlockSpec((H, g4), lambda i: (0, 0)),
    ]
    for l in range(1, L):
        inputs.append(prepped["w_cat_t"][l - 1])
        in_specs.append(pl.BlockSpec((2 * H, g4), lambda i: (0, 0)))
    for l in range(1, L):
        inputs.append(prepped["b_up"][l - 1])
        in_specs.append(pl.BlockSpec((1, g4), lambda i: (0, 0)))
    inputs += [h0_flat, c0_flat, prepped["cls_w_t"], prepped["cls_b"]]
    in_specs += [
        pl.BlockSpec((L * batch, H), lambda i: (0, 0)),
        pl.BlockSpec((L * batch, H), lambda i: (0, 0)),
        pl.BlockSpec((H, out_size), lambda i: (0, 0)),
        pl.BlockSpec((1, out_size), lambda i: (0, 0)),
    ]

    kernel = functools.partial(
        _fused_lstm_cls_kernel,
        num_layers=L, hidden_size=H, batch=batch, seq_len=seq_len)

    return pl.pallas_call(
        kernel,
        out_shape=jax.ShapeDtypeStruct((batch, out_size), jnp.float32),
        grid=(1,),
        in_specs=in_specs,
        out_specs=pl.BlockSpec((batch, out_size), lambda i: (0, 0)),
        compiler_params=pltpu.CompilerParams(
            dimension_semantics=("arbitrary",)),
    )(*inputs)


# ----------------------------------------------------------------------------
# Parameter init (PyTorch layout, uniform(-1/sqrt(H), 1/sqrt(H))) and prep.
# ----------------------------------------------------------------------------
def init_raw_params(key, input_size, hidden_size, num_layers, output_size):
    std = 1.0 / math.sqrt(hidden_size)
    layers = []
    for l in range(num_layers):
        d_in = input_size if l == 0 else hidden_size
        key, k1, k2, k3, k4 = jax.random.split(key, 5)
        layers.append({
            "w_ih": jax.random.uniform(k1, (4 * hidden_size, d_in), jnp.float32, -std, std),
            "w_hh": jax.random.uniform(k2, (4 * hidden_size, hidden_size), jnp.float32, -std, std),
            "b_ih": jax.random.uniform(k3, (4 * hidden_size,), jnp.float32, -std, std),
            "b_hh": jax.random.uniform(k4, (4 * hidden_size,), jnp.float32, -std, std),
        })
    key, k1, k2 = jax.random.split(key, 3)
    raw = {
        "lstm_layers": layers,
        "cls_w": jax.random.uniform(k1, (output_size, hidden_size), jnp.float32, -std, std),
        "cls_b": jax.random.uniform(k2, (output_size,), jnp.float32, -std, std),
    }
    return raw, key


def _round_up(x, m):
    return ((x + m - 1) // m) * m


def prep_params(raw, input_size, hidden_size):
    """Kernel weight layout: transpose, permute gate columns [i,f,g,o]->[i,f,o,g],
    K-concat upper-layer W_ih/W_hh, zero-pad layer-0 input dim to a multiple of 8."""
    H = hidden_size
    d_pad = _round_up(max(input_size, 1), 8)

    def perm(w):   # (..., 4H) columns [i,f,g,o] -> [i,f,o,g]
        return jnp.concatenate(
            [w[..., :2 * H], w[..., 3 * H:4 * H], w[..., 2 * H:3 * H]], axis=-1)

    layers = raw["lstm_layers"]
    l0 = layers[0]
    w_ih0_t = perm(l0["w_ih"].T)                                   # (D, 4H)
    w_ih0_t = jnp.pad(w_ih0_t, ((0, d_pad - input_size), (0, 0)))  # (D_pad, 4H)
    prepped = {
        "d_pad": d_pad,
        "w_ih0_t": w_ih0_t,
        "b0": perm((l0["b_ih"] + l0["b_hh"]).reshape(1, 4 * H)),
        "w_hh0_t": perm(l0["w_hh"].T),
        "w_cat_t": [],
        "b_up": [],
    }
    for l in range(1, len(layers)):
        ly = layers[l]
        prepped["w_cat_t"].append(
            perm(jnp.concatenate([ly["w_ih"].T, ly["w_hh"].T], axis=0)))   # (2H, 4H)
        prepped["b_up"].append(perm((ly["b_ih"] + ly["b_hh"]).reshape(1, 4 * H)))
    prepped["cls_w_t"] = raw["cls_w"].T                                    # (H, O)
    prepped["cls_b"] = raw["cls_b"].reshape(1, -1)                         # (1, O)
    return prepped


# ----------------------------------------------------------------------------
# Pure-JAX reference (PyTorch gate order / layout) for a correctness check.
# ----------------------------------------------------------------------------
def reference_forward(x, raw, h0_all, c0_all, hidden_size):
    H = hidden_size
    HIGH = jax.lax.Precision.HIGHEST
    layer_in = x                                      # (B, S, D)
    for l, ly in enumerate(raw["lstm_layers"]):
        h, c = h0_all[l], c0_all[l]
        outs = []
        for t in range(x.shape[1]):
            gates = (jnp.dot(layer_in[:, t, :], ly["w_ih"].T, precision=HIGH)
                     + jnp.dot(h, ly["w_hh"].T, precision=HIGH)
                     + ly["b_ih"] + ly["b_hh"])
            i_g = jax.nn.sigmoid(gates[:, 0 * H:1 * H])
            f_g = jax.nn.sigmoid(gates[:, 1 * H:2 * H])
            g_g = jnp.tanh(gates[:, 2 * H:3 * H])
            o_g = jax.nn.sigmoid(gates[:, 3 * H:4 * H])
            c = f_g * c + i_g * g_g
            h = o_g * jnp.tanh(c)
            outs.append(h)
        layer_in = jnp.stack(outs, axis=1)
    logits = jnp.dot(layer_in[:, -1, :], raw["cls_w"].T, precision=HIGH) + raw["cls_b"]
    return jax.nn.sigmoid(logits)


if __name__ == "__main__":
    batch_size = 2
    seq_len = 8
    input_size = 4
    hidden_size = 32
    num_layers = 2
    output_size = 4

    key = jax.random.PRNGKey(0)
    raw, key = init_raw_params(key, input_size, hidden_size, num_layers, output_size)
    prepped = prep_params(raw, input_size, hidden_size)

    key, kx, kh, kc = jax.random.split(key, 4)
    x = jax.random.normal(kx, (batch_size, seq_len, input_size), jnp.float32)
    # PyTorch forward resamples h_0/c_0 from randn each call; drawn once here
    # (deterministically) and passed explicitly for reproducibility.
    h0_all = jax.random.normal(kh, (num_layers, batch_size, hidden_size), jnp.float32)
    c0_all = jax.random.normal(kc, (num_layers, batch_size, hidden_size), jnp.float32)

    pred = multilabel_lstm_forward(x, prepped, h0_all, c0_all, num_layers, hidden_size)
    pred = jax.block_until_ready(pred)

    ref = reference_forward(x, raw, h0_all, c0_all, hidden_size)

    assert pred.shape == (batch_size, output_size)
    assert bool(jnp.all(jnp.isfinite(pred)))
    assert bool(jnp.all((pred >= 0.0) & (pred <= 1.0)))
    assert float(jnp.max(jnp.abs(pred - ref))) < 5e-3
    print("KERNEL_OK")
</pallas_src>

<mosaic_0001>
module attributes {stable_mosaic.version = 11 : i64} {
  func.func @_fused_lstm_cls_kernel(%arg0: i32, %arg1: memref<16x8xf32, #tpu.memory_space<vmem>>, %arg2: memref<8x128xf32, #tpu.memory_space<vmem>>, %arg3: memref<1x128xf32, #tpu.memory_space<vmem>>, %arg4: memref<32x128xf32, #tpu.memory_space<vmem>>, %arg5: memref<64x128xf32, #tpu.memory_space<vmem>>, %arg6: memref<1x128xf32, #tpu.memory_space<vmem>>, %arg7: memref<4x32xf32, #tpu.memory_space<vmem>>, %arg8: memref<4x32xf32, #tpu.memory_space<vmem>>, %arg9: memref<32x4xf32, #tpu.memory_space<vmem>>, %arg10: memref<1x4xf32, #tpu.memory_space<vmem>>, %arg11: memref<2x4xf32, #tpu.memory_space<vmem>>) attributes {dimension_semantics = [#tpu.dimension_semantics<arbitrary>], iteration_bounds = array<i64: 1>, scalar_prefetch = 0 : i64, scratch_operands = 0 : i64, tpu.core_type = #tpu.core_type<tc>, window_params = [{pipeline_mode = #tpu.pipeline_mode<synchronous>, transform_indices = @transform_0, window_bounds = array<i64: 16, 8>}, {pipeline_mode = #tpu.pipeline_mode<synchronous>, transform_indices = @transform_1, window_bounds = array<i64: 8, 128>}, {pipeline_mode = #tpu.pipeline_mode<synchronous>, transform_indices = @transform_2, window_bounds = array<i64: 1, 128>}, {pipeline_mode = #tpu.pipeline_mode<synchronous>, transform_indices = @transform_3, window_bounds = array<i64: 32, 128>}, {pipeline_mode = #tpu.pipeline_mode<synchronous>, transform_indices = @transform_4, window_bounds = array<i64: 64, 128>}, {pipeline_mode = #tpu.pipeline_mode<synchronous>, transform_indices = @transform_5, window_bounds = array<i64: 1, 128>}, {pipeline_mode = #tpu.pipeline_mode<synchronous>, transform_indices = @transform_6, window_bounds = array<i64: 4, 32>}, {pipeline_mode = #tpu.pipeline_mode<synchronous>, transform_indices = @transform_7, window_bounds = array<i64: 4, 32>}, {pipeline_mode = #tpu.pipeline_mode<synchronous>, transform_indices = @transform_8, window_bounds = array<i64: 32, 4>}, {pipeline_mode = #tpu.pipeline_mode<synchronous>, transform_indices = @transform_9, window_bounds = array<i64: 1, 4>}, {pipeline_mode = #tpu.pipeline_mode<synchronous>, transform_indices = @transform_10, window_bounds = array<i64: 2, 4>}]} {
    %c0 = arith.constant 0 : index
    %c0_0 = arith.constant 0 : index
    %0 = vector.load %arg1[%c0, %c0_0] : memref<16x8xf32, #tpu.memory_space<vmem>>, vector<16x8xf32>
    %c0_1 = arith.constant 0 : index
    %c0_2 = arith.constant 0 : index
    %1 = vector.load %arg2[%c0_1, %c0_2] : memref<8x128xf32, #tpu.memory_space<vmem>>, vector<8x128xf32>
    %cst = arith.constant dense<0.000000e+00> : vector<16x128xf32>
    %2 = tpu.matmul %0, %1, %cst {dimension_numbers = #tpu.dot_dimension_numbers<[1], [0], [0], [1], [0, 0, 1, 1], [], []>} : vector<16x8xf32>, vector<8x128xf32>, vector<16x128xf32> -> vector<16x128xf32>
    %c0_3 = arith.constant 0 : index
    %c0_4 = arith.constant 0 : index
    %3 = vector.load %arg3[%c0_3, %c0_4] : memref<1x128xf32, #tpu.memory_space<vmem>>, vector<1x128xf32>
    %4 = vector.broadcast %3 : vector<1x128xf32> to vector<16x128xf32>
    %5 = arith.addf %2, %4 : vector<16x128xf32>
    %c0_5 = arith.constant 0 : index
    %c0_6 = arith.constant 0 : index
    %6 = vector.load %arg4[%c0_5, %c0_6] : memref<32x128xf32, #tpu.memory_space<vmem>>, vector<32x128xf32>
    %c0_7 = arith.constant 0 : index
    %c0_8 = arith.constant 0 : index
    %7 = vector.load %arg5[%c0_7, %c0_8] : memref<64x128xf32, #tpu.memory_space<vmem>>, vector<64x128xf32>
    %c0_9 = arith.constant 0 : index
    %c0_10 = arith.constant 0 : index
    %8 = vector.load %arg6[%c0_9, %c0_10] : memref<1x128xf32, #tpu.memory_space<vmem>>, vector<1x128xf32>
    %c0_11 = arith.constant 0 : index
    %c0_12 = arith.constant 0 : index
    %9 = vector.load %arg7[%c0_11, %c0_12] : memref<4x32xf32, #tpu.memory_space<vmem>>, vector<2x32xf32>
    %c2 = arith.constant 2 : index
    %c0_13 = arith.constant 0 : index
    %10 = vector.load %arg7[%c2, %c0_13] : memref<4x32xf32, #tpu.memory_space<vmem>>, vector<2x32xf32>
    %c0_14 = arith.constant 0 : index
    %c0_15 = arith.constant 0 : index
    %11 = vector.load %arg8[%c0_14, %c0_15] : memref<4x32xf32, #tpu.memory_space<vmem>>, vector<2x32xf32>
    %c2_16 = arith.constant 2 : index
    %c0_17 = arith.constant 0 : index
    %12 = vector.load %arg8[%c2_16, %c0_17] : memref<4x32xf32, #tpu.memory_space<vmem>>, vector<2x32xf32>
    %13 = vector.extract_strided_slice %5 {offsets = [0, 0], sizes = [2, 128], strides = [1, 1]} : vector<16x128xf32> to vector<2x128xf32>
    %cst_18 = arith.constant dense<0.000000e+00> : vector<2x128xf32>
    %14 = tpu.matmul %9, %6, %cst_18 {dimension_numbers = #tpu.dot_dimension_numbers<[1], [0], [0], [1], [0, 0, 1, 1], [], []>} : vector<2x32xf32>, vector<32x128xf32>, vector<2x128xf32> -> vector<2x128xf32>
    %15 = arith.addf %13, %14 : vector<2x128xf32>
    %16 = vector.extract_strided_slice %15 {offsets = [0, 0], sizes = [2, 96], strides = [1, 1]} : vector<2x128xf32> to vector<2x96xf32>
    %17 = arith.negf %16 : vector<2x96xf32>
    %18 = math.exp %17 : vector<2x96xf32>
    %cst_19 = arith.constant 1.000000e+00 : f32
    %19 = vector.broadcast %cst_19 : f32 to vector<2x96xf32>
    %20 = arith.addf %19, %18 : vector<2x96xf32>
    %21 = arith.divf %19, %20 : vector<2x96xf32>
    %22 = vector.extract_strided_slice %21 {offsets = [0, 0], sizes = [2, 32], strides = [1, 1]} : vector<2x96xf32> to vector<2x32xf32>
    %23 = vector.extract_strided_slice %21 {offsets = [0, 32], sizes = [2, 32], strides = [1, 1]} : vector<2x96xf32> to vector<2x32xf32>
    %24 = vector.extract_strided_slice %21 {offsets = [0, 64], sizes = [2, 32], strides = [1, 1]} : vector<2x96xf32> to vector<2x32xf32>
    %25 = vector.extract_strided_slice %15 {offsets = [0, 96], sizes = [2, 32], strides = [1, 1]} : vector<2x128xf32> to vector<2x32xf32>
    %26 = math.tanh %25 : vector<2x32xf32>
    %27 = arith.mulf %23, %11 : vector<2x32xf32>
    %28 = arith.mulf %22, %26 : vector<2x32xf32>
    %29 = arith.addf %27, %28 : vector<2x32xf32>
    %30 = math.tanh %29 : vector<2x32xf32>
    %31 = arith.mulf %24, %30 : vector<2x32xf32>
    %32 = vector.extract_strided_slice %5 {offsets = [2, 0], sizes = [2, 128], strides = [1, 1]} : vector<16x128xf32> to vector<2x128xf32>
    %cst_20 = arith.constant dense<0.000000e+00> : vector<2x128xf32>
    %33 = tpu.matmul %31, %6, %cst_20 {dimension_numbers = #tpu.dot_dimension_numbers<[1], [0], [0], [1], [0, 0, 1, 1], [], []>} : vector<2x32xf32>, vector<32x128xf32>, vector<2x128xf32> -> vector<2x128xf32>
    %34 = arith.addf %32, %33 : vector<2x128xf32>
    %35 = vector.extract_strided_slice %34 {offsets = [0, 0], sizes = [2, 96], strides = [1, 1]} : vector<2x128xf32> to vector<2x96xf32>
    %36 = arith.negf %35 : vector<2x96xf32>
    %37 = math.exp %36 : vector<2x96xf32>
    %cst_21 = arith.constant 1.000000e+00 : f32
    %38 = vector.broadcast %cst_21 : f32 to vector<2x96xf32>
    %39 = arith.addf %38, %37 : vector<2x96xf32>
    %40 = arith.divf %38, %39 : vector<2x96xf32>
    %41 = vector.extract_strided_slice %40 {offsets = [0, 0], sizes = [2, 32], strides = [1, 1]} : vector<2x96xf32> to vector<2x32xf32>
    %42 = vector.extract_strided_slice %40 {offsets = [0, 32], sizes = [2, 32], strides = [1, 1]} : vector<2x96xf32> to vector<2x32xf32>
    %43 = vector.extract_strided_slice %40 {offsets = [0, 64], sizes = [2, 32], strides = [1, 1]} : vector<2x96xf32> to vector<2x32xf32>
    %44 = vector.extract_strided_slice %34 {offsets = [0, 96], sizes = [2, 32], strides = [1, 1]} : vector<2x128xf32> to vector<2x32xf32>
    %45 = math.tanh %44 : vector<2x32xf32>
    %46 = arith.mulf %42, %29 : vector<2x32xf32>
    %47 = arith.mulf %41, %45 : vector<2x32xf32>
    %48 = arith.addf %46, %47 : vector<2x32xf32>
    %49 = math.tanh %48 : vector<2x32xf32>
    %50 = arith.mulf %43, %49 : vector<2x32xf32>
    %51 = tpu.concatenate %31, %10 in 1 : vector<2x32xf32>, vector<2x32xf32> -> vector<2x64xf32>
    %cst_22 = arith.constant dense<0.000000e+00> : vector<2x128xf32>
    %52 = tpu.matmul %51, %7, %cst_22 {dimension_numbers = #tpu.dot_dimension_numbers<[1], [0], [0], [1], [0, 0, 1, 1], [], []>} : vector<2x64xf32>, vector<64x128xf32>, vector<2x128xf32> -> vector<2x128xf32>
    %53 = vector.broadcast %8 : vector<1x128xf32> to vector<2x128xf32>
    %54 = arith.addf %52, %53 : vector<2x128xf32>
    %55 = vector.extract_strided_slice %54 {offsets = [0, 0], sizes = [2, 96], strides = [1, 1]} : vector<2x128xf32> to vector<2x96xf32>
    %56 = arith.negf %55 : vector<2x96xf32>
    %57 = math.exp %56 : vector<2x96xf32>
    %cst_23 = arith.constant 1.000000e+00 : f32
    %58 = vector.broadcast %cst_23 : f32 to vector<2x96xf32>
    %59 = arith.addf %58, %57 : vector<2x96xf32>
    %60 = arith.divf %58, %59 : vector<2x96xf32>
    %61 = vector.extract_strided_slice %60 {offsets = [0, 0], sizes = [2, 32], strides = [1, 1]} : vector<2x96xf32> to vector<2x32xf32>
    %62 = vector.extract_strided_slice %60 {offsets = [0, 32], sizes = [2, 32], strides = [1, 1]} : vector<2x96xf32> to vector<2x32xf32>
    %63 = vector.extract_strided_slice %60 {offsets = [0, 64], sizes = [2, 32], strides = [1, 1]} : vector<2x96xf32> to vector<2x32xf32>
    %64 = vector.extract_strided_slice %54 {offsets = [0, 96], sizes = [2, 32], strides = [1, 1]} : vector<2x128xf32> to vector<2x32xf32>
    %65 = math.tanh %64 : vector<2x32xf32>
    %66 = arith.mulf %62, %12 : vector<2x32xf32>
    %67 = arith.mulf %61, %65 : vector<2x32xf32>
    %68 = arith.addf %66, %67 : vector<2x32xf32>
    %69 = math.tanh %68 : vector<2x32xf32>
    %70 = arith.mulf %63, %69 : vector<2x32xf32>
    %71 = vector.extract_strided_slice %5 {offsets = [4, 0], sizes = [2, 128], strides = [1, 1]} : vector<16x128xf32> to vector<2x128xf32>
    %cst_24 = arith.constant dense<0.000000e+00> : vector<2x128xf32>
    %72 = tpu.matmul %50, %6, %cst_24 {dimension_numbers = #tpu.dot_dimension_numbers<[1], [0], [0], [1], [0, 0, 1, 1], [], []>} : vector<2x32xf32>, vector<32x128xf32>, vector<2x128xf32> -> vector<2x128xf32>
    %73 = arith.addf %71, %72 : vector<2x128xf32>
    %74 = vector.extract_strided_slice %73 {offsets = [0, 0], sizes = [2, 96], strides = [1, 1]} : vector<2x128xf32> to vector<2x96xf32>
    %75 = arith.negf %74 : vector<2x96xf32>
    %76 = math.exp %75 : vector<2x96xf32>
    %cst_25 = arith.constant 1.000000e+00 : f32
    %77 = vector.broadcast %cst_25 : f32 to vector<2x96xf32>
    %78 = arith.addf %77, %76 : vector<2x96xf32>
    %79 = arith.divf %77, %78 : vector<2x96xf32>
    %80 = vector.extract_strided_slice %79 {offsets = [0, 0], sizes = [2, 32], strides = [1, 1]} : vector<2x96xf32> to vector<2x32xf32>
    %81 = vector.extract_strided_slice %79 {offsets = [0, 32], sizes = [2, 32], strides = [1, 1]} : vector<2x96xf32> to vector<2x32xf32>
    %82 = vector.extract_strided_slice %79 {offsets = [0, 64], sizes = [2, 32], strides = [1, 1]} : vector<2x96xf32> to vector<2x32xf32>
    %83 = vector.extract_strided_slice %73 {offsets = [0, 96], sizes = [2, 32], strides = [1, 1]} : vector<2x128xf32> to vector<2x32xf32>
    %84 = math.tanh %83 : vector<2x32xf32>
    %85 = arith.mulf %81, %48 : vector<2x32xf32>
    %86 = arith.mulf %80, %84 : vector<2x32xf32>
    %87 = arith.addf %85, %86 : vector<2x32xf32>
    %88 = math.tanh %87 : vector<2x32xf32>
    %89 = arith.mulf %82, %88 : vector<2x32xf32>
    %90 = tpu.concatenate %50, %70 in 1 : vector<2x32xf32>, vector<2x32xf32> -> vector<2x64xf32>
    %cst_26 = arith.constant dense<0.000000e+00> : vector<2x128xf32>
    %91 = tpu.matmul %90, %7, %cst_26 {dimension_numbers = #tpu.dot_dimension_numbers<[1], [0], [0], [1], [0, 0, 1, 1], [], []>} : vector<2x64xf32>, vector<64x128xf32>, vector<2x128xf32> -> vector<2x128xf32>
    %92 = vector.broadcast %8 : vector<1x128xf32> to vector<2x128xf32>
    %93 = arith.addf %91, %92 : vector<2x128xf32>
    %94 = vector.extract_strided_slice %93 {offsets = [0, 0], sizes = [2, 96], strides = [1, 1]} : vector<2x128xf32> to vector<2x96xf32>
    %95 = arith.negf %94 : vector<2x96xf32>
    %96 = math.exp %95 : vector<2x96xf32>
    %cst_27 = arith.constant 1.000000e+00 : f32
    %97 = vector.broadcast %cst_27 : f32 to vector<2x96xf32>
    %98 = arith.addf %97, %96 : vector<2x96xf32>
    %99 = arith.divf %97, %98 : vector<2x96xf32>
    %100 = vector.extract_strided_slice %99 {offsets = [0, 0], sizes = [2, 32], strides = [1, 1]} : vector<2x96xf32> to vector<2x32xf32>
    %101 = vector.extract_strided_slice %99 {offsets = [0, 32], sizes = [2, 32], strides = [1, 1]} : vector<2x96xf32> to vector<2x32xf32>
    %102 = vector.extract_strided_slice %99 {offsets = [0, 64], sizes = [2, 32], strides = [1, 1]} : vector<2x96xf32> to vector<2x32xf32>
    %103 = vector.extract_strided_slice %93 {offsets = [0, 96], sizes = [2, 32], strides = [1, 1]} : vector<2x128xf32> to vector<2x32xf32>
    %104 = math.tanh %103 : vector<2x32xf32>
    %105 = arith.mulf %101, %68 : vector<2x32xf32>
    %106 = arith.mulf %100, %104 : vector<2x32xf32>
    %107 = arith.addf %105, %106 : vector<2x32xf32>
    %108 = math.tanh %107 : vector<2x32xf32>
    %109 = arith.mulf %102, %108 : vector<2x32xf32>
    %110 = vector.extract_strided_slice %5 {offsets = [6, 0], sizes = [2, 128], strides = [1, 1]} : vector<16x128xf32> to vector<2x128xf32>
    %cst_28 = arith.constant dense<0.000000e+00> : vector<2x128xf32>
    %111 = tpu.matmul %89, %6, %cst_28 {dimension_numbers = #tpu.dot_dimension_numbers<[1], [0], [0], [1], [0, 0, 1, 1], [], []>} : vector<2x32xf32>, vector<32x128xf32>, vector<2x128xf32> -> vector<2x128xf32>
    %112 = arith.addf %110, %111 : vector<2x128xf32>
    %113 = vector.extract_strided_slice %112 {offsets = [0, 0], sizes = [2, 96], strides = [1, 1]} : vector<2x128xf32> to vector<2x96xf32>
    %114 = arith.negf %113 : vector<2x96xf32>
    %115 = math.exp %114 : vector<2x96xf32>
    %cst_29 = arith.constant 1.000000e+00 : f32
    %116 = vector.broadcast %cst_29 : f32 to vector<2x96xf32>
    %117 = arith.addf %116, %115 : vector<2x96xf32>
    %118 = arith.divf %116, %117 : vector<2x96xf32>
    %119 = vector.extract_strided_slice %118 {offsets = [0, 0], sizes = [2, 32], strides = [1, 1]} : vector<2x96xf32> to vector<2x32xf32>
    %120 = vector.extract_strided_slice %118 {offsets = [0, 32], sizes = [2, 32], strides = [1, 1]} : vector<2x96xf32> to vector<2x32xf32>
    %121 = vector.extract_strided_slice %118 {offsets = [0, 64], sizes = [2, 32], strides = [1, 1]} : vector<2x96xf32> to vector<2x32xf32>
    %122 = vector.extract_strided_slice %112 {offsets = [0, 96], sizes = [2, 32], strides = [1, 1]} : vector<2x128xf32> to vector<2x32xf32>
    %123 = math.tanh %122 : vector<2x32xf32>
    %124 = arith.mulf %120, %87 : vector<2x32xf32>
    %125 = arith.mulf %119, %123 : vector<2x32xf32>
    %126 = arith.addf %124, %125 : vector<2x32xf32>
    %127 = math.tanh %126 : vector<2x32xf32>
    %128 = arith.mulf %121, %127 : vector<2x32xf32>
    %129 = tpu.concatenate %89, %109 in 1 : vector<2x32xf32>, vector<2x32xf32> -> vector<2x64xf32>
    %cst_30 = arith.constant dense<0.000000e+00> : vector<2x128xf32>
    %130 = tpu.matmul %129, %7, %cst_30 {dimension_numbers = #tpu.dot_dimension_numbers<[1], [0], [0], [1], [0, 0, 1, 1], [], []>} : vector<2x64xf32>, vector<64x128xf32>, vector<2x128xf32> -> vector<2x128xf32>
    %131 = vector.broadcast %8 : vector<1x128xf32> to vector<2x128xf32>
    %132 = arith.addf %130, %131 : vector<2x128xf32>
    %133 = vector.extract_strided_slice %132 {offsets = [0, 0], sizes = [2, 96], strides = [1, 1]} : vector<2x128xf32> to vector<2x96xf32>
    %134 = arith.negf %133 : vector<2x96xf32>
    %135 = math.exp %134 : vector<2x96xf32>
    %cst_31 = arith.constant 1.000000e+00 : f32
    %136 = vector.broadcast %cst_31 : f32 to vector<2x96xf32>
    %137 = arith.addf %136, %135 : vector<2x96xf32>
    %138 = arith.divf %136, %137 : vector<2x96xf32>
    %139 = vector.extract_strided_slice %138 {offsets = [0, 0], sizes = [2, 32], strides = [1, 1]} : vector<2x96xf32> to vector<2x32xf32>
    %140 = vector.extract_strided_slice %138 {offsets = [0, 32], sizes = [2, 32], strides = [1, 1]} : vector<2x96xf32> to vector<2x32xf32>
    %141 = vector.extract_strided_slice %138 {offsets = [0, 64], sizes = [2, 32], strides = [1, 1]} : vector<2x96xf32> to vector<2x32xf32>
    %142 = vector.extract_strided_slice %132 {offsets = [0, 96], sizes = [2, 32], strides = [1, 1]} : vector<2x128xf32> to vector<2x32xf32>
    %143 = math.tanh %142 : vector<2x32xf32>
    %144 = arith.mulf %140, %107 : vector<2x32xf32>
    %145 = arith.mulf %139, %143 : vector<2x32xf32>
    %146 = arith.addf %144, %145 : vector<2x32xf32>
    %147 = math.tanh %146 : vector<2x32xf32>
    %148 = arith.mulf %141, %147 : vector<2x32xf32>
    %149 = vector.extract_strided_slice %5 {offsets = [8, 0], sizes = [2, 128], strides = [1, 1]} : vector<16x128xf32> to vector<2x128xf32>
    %cst_32 = arith.constant dense<0.000000e+00> : vector<2x128xf32>
    %150 = tpu.matmul %128, %6, %cst_32 {dimension_numbers = #tpu.dot_dimension_numbers<[1], [0], [0], [1], [0, 0, 1, 1], [], []>} : vector<2x32xf32>, vector<32x128xf32>, vector<2x128xf32> -> vector<2x128xf32>
    %151 = arith.addf %149, %150 : vector<2x128xf32>
    %152 = vector.extract_strided_slice %151 {offsets = [0, 0], sizes = [2, 96], strides = [1, 1]} : vector<2x128xf32> to vector<2x96xf32>
    %153 = arith.negf %152 : vector<2x96xf32>
    %154 = math.exp %153 : vector<2x96xf32>
    %cst_33 = arith.constant 1.000000e+00 : f32
    %155 = vector.broadcast %cst_33 : f32 to vector<2x96xf32>
    %156 = arith.addf %155, %154 : vector<2x96xf32>
    %157 = arith.divf %155, %156 : vector<2x96xf32>
    %158 = vector.extract_strided_slice %157 {offsets = [0, 0], sizes = [2, 32], strides = [1, 1]} : vector<2x96xf32> to vector<2x32xf32>
    %159 = vector.extract_strided_slice %157 {offsets = [0, 32], sizes = [2, 32], strides = [1, 1]} : vector<2x96xf32> to vector<2x32xf32>
    %160 = vector.extract_strided_slice %157 {offsets = [0, 64], sizes = [2, 32], strides = [1, 1]} : vector<2x96xf32> to vector<2x32xf32>
    %161 = vector.extract_strided_slice %151 {offsets = [0, 96], sizes = [2, 32], strides = [1, 1]} : vector<2x128xf32> to vector<2x32xf32>
    %162 = math.tanh %161 : vector<2x32xf32>
    %163 = arith.mulf %159, %126 : vector<2x32xf32>
    %164 = arith.mulf %158, %162 : vector<2x32xf32>
    %165 = arith.addf %163, %164 : vector<2x32xf32>
    %166 = math.tanh %165 : vector<2x32xf32>
    %167 = arith.mulf %160, %166 : vector<2x32xf32>
    %168 = tpu.concatenate %128, %148 in 1 : vector<2x32xf32>, vector<2x32xf32> -> vector<2x64xf32>
    %cst_34 = arith.constant dense<0.000000e+00> : vector<2x128xf32>
    %169 = tpu.matmul %168, %7, %cst_34 {dimension_numbers = #tpu.dot_dimension_numbers<[1], [0], [0], [1], [0, 0, 1, 1], [], []>} : vector<2x64xf32>, vector<64x128xf32>, vector<2x128xf32> -> vector<2x128xf32>
    %170 = vector.broadcast %8 : vector<1x128xf32> to vector<2x128xf32>
    %171 = arith.addf %169, %170 : vector<2x128xf32>
    %172 = vector.extract_strided_slice %171 {offsets = [0, 0], sizes = [2, 96], strides = [1, 1]} : vector<2x128xf32> to vector<2x96xf32>
    %173 = arith.negf %172 : vector<2x96xf32>
    %174 = math.exp %173 : vector<2x96xf32>
    %cst_35 = arith.constant 1.000000e+00 : f32
    %175 = vector.broadcast %cst_35 : f32 to vector<2x96xf32>
    %176 = arith.addf %175, %174 : vector<2x96xf32>
    %177 = arith.divf %175, %176 : vector<2x96xf32>
    %178 = vector.extract_strided_slice %177 {offsets = [0, 0], sizes = [2, 32], strides = [1, 1]} : vector<2x96xf32> to vector<2x32xf32>
    %179 = vector.extract_strided_slice %177 {offsets = [0, 32], sizes = [2, 32], strides = [1, 1]} : vector<2x96xf32> to vector<2x32xf32>
    %180 = vector.extract_strided_slice %177 {offsets = [0, 64], sizes = [2, 32], strides = [1, 1]} : vector<2x96xf32> to vector<2x32xf32>
    %181 = vector.extract_strided_slice %171 {offsets = [0, 96], sizes = [2, 32], strides = [1, 1]} : vector<2x128xf32> to vector<2x32xf32>
    %182 = math.tanh %181 : vector<2x32xf32>
    %183 = arith.mulf %179, %146 : vector<2x32xf32>
    %184 = arith.mulf %178, %182 : vector<2x32xf32>
    %185 = arith.addf %183, %184 : vector<2x32xf32>
    %186 = math.tanh %185 : vector<2x32xf32>
    %187 = arith.mulf %180, %186 : vector<2x32xf32>
    %188 = vector.extract_strided_slice %5 {offsets = [10, 0], sizes = [2, 128], strides = [1, 1]} : vector<16x128xf32> to vector<2x128xf32>
    %cst_36 = arith.constant dense<0.000000e+00> : vector<2x128xf32>
    %189 = tpu.matmul %167, %6, %cst_36 {dimension_numbers = #tpu.dot_dimension_numbers<[1], [0], [0], [1], [0, 0, 1, 1], [], []>} : vector<2x32xf32>, vector<32x128xf32>, vector<2x128xf32> -> vector<2x128xf32>
    %190 = arith.addf %188, %189 : vector<2x128xf32>
    %191 = vector.extract_strided_slice %190 {offsets = [0, 0], sizes = [2, 96], strides = [1, 1]} : vector<2x128xf32> to vector<2x96xf32>
    %192 = arith.negf %191 : vector<2x96xf32>
    %193 = math.exp %192 : vector<2x96xf32>
    %cst_37 = arith.constant 1.000000e+00 : f32
    %194 = vector.broadcast %cst_37 : f32 to vector<2x96xf32>
    %195 = arith.addf %194, %193 : vector<2x96xf32>
    %196 = arith.divf %194, %195 : vector<2x96xf32>
    %197 = vector.extract_strided_slice %196 {offsets = [0, 0], sizes = [2, 32], strides = [1, 1]} : vector<2x96xf32> to vector<2x32xf32>
    %198 = vector.extract_strided_slice %196 {offsets = [0, 32], sizes = [2, 32], strides = [1, 1]} : vector<2x96xf32> to vector<2x32xf32>
    %199 = vector.extract_strided_slice %196 {offsets = [0, 64], sizes = [2, 32], strides = [1, 1]} : vector<2x96xf32> to vector<2x32xf32>
    %200 = vector.extract_strided_slice %190 {offsets = [0, 96], sizes = [2, 32], strides = [1, 1]} : vector<2x128xf32> to vector<2x32xf32>
    %201 = math.tanh %200 : vector<2x32xf32>
    %202 = arith.mulf %198, %165 : vector<2x32xf32>
    %203 = arith.mulf %197, %201 : vector<2x32xf32>
    %204 = arith.addf %202, %203 : vector<2x32xf32>
    %205 = math.tanh %204 : vector<2x32xf32>
    %206 = arith.mulf %199, %205 : vector<2x32xf32>
    %207 = tpu.concatenate %167, %187 in 1 : vector<2x32xf32>, vector<2x32xf32> -> vector<2x64xf32>
    %cst_38 = arith.constant dense<0.000000e+00> : vector<2x128xf32>
    %208 = tpu.matmul %207, %7, %cst_38 {dimension_numbers = #tpu.dot_dimension_numbers<[1], [0], [0], [1], [0, 0, 1, 1], [], []>} : vector<2x64xf32>, vector<64x128xf32>, vector<2x128xf32> -> vector<2x128xf32>
    %209 = vector.broadcast %8 : vector<1x128xf32> to vector<2x128xf32>
    %210 = arith.addf %208, %209 : vector<2x128xf32>
    %211 = vector.extract_strided_slice %210 {offsets = [0, 0], sizes = [2, 96], strides = [1, 1]} : vector<2x128xf32> to vector<2x96xf32>
    %212 = arith.negf %211 : vector<2x96xf32>
    %213 = math.exp %212 : vector<2x96xf32>
    %cst_39 = arith.constant 1.000000e+00 : f32
    %214 = vector.broadcast %cst_39 : f32 to vector<2x96xf32>
    %215 = arith.addf %214, %213 : vector<2x96xf32>
    %216 = arith.divf %214, %215 : vector<2x96xf32>
    %217 = vector.extract_strided_slice %216 {offsets = [0, 0], sizes = [2, 32], strides = [1, 1]} : vector<2x96xf32> to vector<2x32xf32>
    %218 = vector.extract_strided_slice %216 {offsets = [0, 32], sizes = [2, 32], strides = [1, 1]} : vector<2x96xf32> to vector<2x32xf32>
    %219 = vector.extract_strided_slice %216 {offsets = [0, 64], sizes = [2, 32], strides = [1, 1]} : vector<2x96xf32> to vector<2x32xf32>
    %220 = vector.extract_strided_slice %210 {offsets = [0, 96], sizes = [2, 32], strides = [1, 1]} : vector<2x128xf32> to vector<2x32xf32>
    %221 = math.tanh %220 : vector<2x32xf32>
    %222 = arith.mulf %218, %185 : vector<2x32xf32>
    %223 = arith.mulf %217, %221 : vector<2x32xf32>
    %224 = arith.addf %222, %223 : vector<2x32xf32>
    %225 = math.tanh %224 : vector<2x32xf32>
    %226 = arith.mulf %219, %225 : vector<2x32xf32>
    %227 = vector.extract_strided_slice %5 {offsets = [12, 0], sizes = [2, 128], strides = [1, 1]} : vector<16x128xf32> to vector<2x128xf32>
    %cst_40 = arith.constant dense<0.000000e+00> : vector<2x128xf32>
    %228 = tpu.matmul %206, %6, %cst_40 {dimension_numbers = #tpu.dot_dimension_numbers<[1], [0], [0], [1], [0, 0, 1, 1], [], []>} : vector<2x32xf32>, vector<32x128xf32>, vector<2x128xf32> -> vector<2x128xf32>
    %229 = arith.addf %227, %228 : vector<2x128xf32>
    %230 = vector.extract_strided_slice %229 {offsets = [0, 0], sizes = [2, 96], strides = [1, 1]} : vector<2x128xf32> to vector<2x96xf32>
    %231 = arith.negf %230 : vector<2x96xf32>
    %232 = math.exp %231 : vector<2x96xf32>
    %cst_41 = arith.constant 1.000000e+00 : f32
    %233 = vector.broadcast %cst_41 : f32 to vector<2x96xf32>
    %234 = arith.addf %233, %232 : vector<2x96xf32>
    %235 = arith.divf %233, %234 : vector<2x96xf32>
    %236 = vector.extract_strided_slice %235 {offsets = [0, 0], sizes = [2, 32], strides = [1, 1]} : vector<2x96xf32> to vector<2x32xf32>
    %237 = vector.extract_strided_slice %235 {offsets = [0, 32], sizes = [2, 32], strides = [1, 1]} : vector<2x96xf32> to vector<2x32xf32>
    %238 = vector.extract_strided_slice %235 {offsets = [0, 64], sizes = [2, 32], strides = [1, 1]} : vector<2x96xf32> to vector<2x32xf32>
    %239 = vector.extract_strided_slice %229 {offsets = [0, 96], sizes = [2, 32], strides = [1, 1]} : vector<2x128xf32> to vector<2x32xf32>
    %240 = math.tanh %239 : vector<2x32xf32>
    %241 = arith.mulf %237, %204 : vector<2x32xf32>
    %242 = arith.mulf %236, %240 : vector<2x32xf32>
    %243 = arith.addf %241, %242 : vector<2x32xf32>
    %244 = math.tanh %243 : vector<2x32xf32>
    %245 = arith.mulf %238, %244 : vector<2x32xf32>
    %246 = tpu.concatenate %206, %226 in 1 : vector<2x32xf32>, vector<2x32xf32> -> vector<2x64xf32>
    %cst_42 = arith.constant dense<0.000000e+00> : vector<2x128xf32>
    %247 = tpu.matmul %246, %7, %cst_42 {dimension_numbers = #tpu.dot_dimension_numbers<[1], [0], [0], [1], [0, 0, 1, 1], [], []>} : vector<2x64xf32>, vector<64x128xf32>, vector<2x128xf32> -> vector<2x128xf32>
    %248 = vector.broadcast %8 : vector<1x128xf32> to vector<2x128xf32>
    %249 = arith.addf %247, %248 : vector<2x128xf32>
    %250 = vector.extract_strided_slice %249 {offsets = [0, 0], sizes = [2, 96], strides = [1, 1]} : vector<2x128xf32> to vector<2x96xf32>
    %251 = arith.negf %250 : vector<2x96xf32>
    %252 = math.exp %251 : vector<2x96xf32>
    %cst_43 = arith.constant 1.000000e+00 : f32
    %253 = vector.broadcast %cst_43 : f32 to vector<2x96xf32>
    %254 = arith.addf %253, %252 : vector<2x96xf32>
    %255 = arith.divf %253, %254 : vector<2x96xf32>
    %256 = vector.extract_strided_slice %255 {offsets = [0, 0], sizes = [2, 32], strides = [1, 1]} : vector<2x96xf32> to vector<2x32xf32>
    %257 = vector.extract_strided_slice %255 {offsets = [0, 32], sizes = [2, 32], strides = [1, 1]} : vector<2x96xf32> to vector<2x32xf32>
    %258 = vector.extract_strided_slice %255 {offsets = [0, 64], sizes = [2, 32], strides = [1, 1]} : vector<2x96xf32> to vector<2x32xf32>
    %259 = vector.extract_strided_slice %249 {offsets = [0, 96], sizes = [2, 32], strides = [1, 1]} : vector<2x128xf32> to vector<2x32xf32>
    %260 = math.tanh %259 : vector<2x32xf32>
    %261 = arith.mulf %257, %224 : vector<2x32xf32>
    %262 = arith.mulf %256, %260 : vector<2x32xf32>
    %263 = arith.addf %261, %262 : vector<2x32xf32>
    %264 = math.tanh %263 : vector<2x32xf32>
    %265 = arith.mulf %258, %264 : vector<2x32xf32>
    %266 = vector.extract_strided_slice %5 {offsets = [14, 0], sizes = [2, 128], strides = [1, 1]} : vector<16x128xf32> to vector<2x128xf32>
    %cst_44 = arith.constant dense<0.000000e+00> : vector<2x128xf32>
    %267 = tpu.matmul %245, %6, %cst_44 {dimension_numbers = #tpu.dot_dimension_numbers<[1], [0], [0], [1], [0, 0, 1, 1], [], []>} : vector<2x32xf32>, vector<32x128xf32>, vector<2x128xf32> -> vector<2x128xf32>
    %268 = arith.addf %266, %267 : vector<2x128xf32>
    %269 = vector.extract_strided_slice %268 {offsets = [0, 0], sizes = [2, 96], strides = [1, 1]} : vector<2x128xf32> to vector<2x96xf32>
    %270 = arith.negf %269 : vector<2x96xf32>
    %271 = math.exp %270 : vector<2x96xf32>
    %cst_45 = arith.constant 1.000000e+00 : f32
    %272 = vector.broadcast %cst_45 : f32 to vector<2x96xf32>
    %273 = arith.addf %272, %271 : vector<2x96xf32>
    %274 = arith.divf %272, %273 : vector<2x96xf32>
    %275 = vector.extract_strided_slice %274 {offsets = [0, 0], sizes = [2, 32], strides = [1, 1]} : vector<2x96xf32> to vector<2x32xf32>
    %276 = vector.extract_strided_slice %274 {offsets = [0, 32], sizes = [2, 32], strides = [1, 1]} : vector<2x96xf32> to vector<2x32xf32>
    %277 = vector.extract_strided_slice %274 {offsets = [0, 64], sizes = [2, 32], strides = [1, 1]} : vector<2x96xf32> to vector<2x32xf32>
    %278 = vector.extract_strided_slice %268 {offsets = [0, 96], sizes = [2, 32], strides = [1, 1]} : vector<2x128xf32> to vector<2x32xf32>
    %279 = math.tanh %278 : vector<2x32xf32>
    %280 = arith.mulf %276, %243 : vector<2x32xf32>
    %281 = arith.mulf %275, %279 : vector<2x32xf32>
    %282 = arith.addf %280, %281 : vector<2x32xf32>
    %283 = math.tanh %282 : vector<2x32xf32>
    %284 = arith.mulf %277, %283 : vector<2x32xf32>
    %285 = tpu.concatenate %245, %265 in 1 : vector<2x32xf32>, vector<2x32xf32> -> vector<2x64xf32>
    %cst_46 = arith.constant dense<0.000000e+00> : vector<2x128xf32>
    %286 = tpu.matmul %285, %7, %cst_46 {dimension_numbers = #tpu.dot_dimension_numbers<[1], [0], [0], [1], [0, 0, 1, 1], [], []>} : vector<2x64xf32>, vector<64x128xf32>, vector<2x128xf32> -> vector<2x128xf32>
    %287 = vector.broadcast %8 : vector<1x128xf32> to vector<2x128xf32>
    %288 = arith.addf %286, %287 : vector<2x128xf32>
    %289 = vector.extract_strided_slice %288 {offsets = [0, 0], sizes = [2, 96], strides = [1, 1]} : vector<2x128xf32> to vector<2x96xf32>
    %290 = arith.negf %289 : vector<2x96xf32>
    %291 = math.exp %290 : vector<2x96xf32>
    %cst_47 = arith.constant 1.000000e+00 : f32
    %292 = vector.broadcast %cst_47 : f32 to vector<2x96xf32>
    %293 = arith.addf %292, %291 : vector<2x96xf32>
    %294 = arith.divf %292, %293 : vector<2x96xf32>
    %295 = vector.extract_strided_slice %294 {offsets = [0, 0], sizes = [2, 32], strides = [1, 1]} : vector<2x96xf32> to vector<2x32xf32>
    %296 = vector.extract_strided_slice %294 {offsets = [0, 32], sizes = [2, 32], strides = [1, 1]} : vector<2x96xf32> to vector<2x32xf32>
    %297 = vector.extract_strided_slice %294 {offsets = [0, 64], sizes = [2, 32], strides = [1, 1]} : vector<2x96xf32> to vector<2x32xf32>
    %298 = vector.extract_strided_slice %288 {offsets = [0, 96], sizes = [2, 32], strides = [1, 1]} : vector<2x128xf32> to vector<2x32xf32>
    %299 = math.tanh %298 : vector<2x32xf32>
    %300 = arith.mulf %296, %263 : vector<2x32xf32>
    %301 = arith.mulf %295, %299 : vector<2x32xf32>
    %302 = arith.addf %300, %301 : vector<2x32xf32>
    %303 = math.tanh %302 : vector<2x32xf32>
    %304 = arith.mulf %297, %303 : vector<2x32xf32>
    %305 = tpu.concatenate %284, %304 in 1 : vector<2x32xf32>, vector<2x32xf32> -> vector<2x64xf32>
    %cst_48 = arith.constant dense<0.000000e+00> : vector<2x128xf32>
    %306 = tpu.matmul %305, %7, %cst_48 {dimension_numbers = #tpu.dot_dimension_numbers<[1], [0], [0], [1], [0, 0, 1, 1], [], []>} : vector<2x64xf32>, vector<64x128xf32>, vector<2x128xf32> -> vector<2x128xf32>
    %307 = vector.broadcast %8 : vector<1x128xf32> to vector<2x128xf32>
    %308 = arith.addf %306, %307 : vector<2x128xf32>
    %309 = vector.extract_strided_slice %308 {offsets = [0, 0], sizes = [2, 96], strides = [1, 1]} : vector<2x128xf32> to vector<2x96xf32>
    %310 = arith.negf %309 : vector<2x96xf32>
    %311 = math.exp %310 : vector<2x96xf32>
    %cst_49 = arith.constant 1.000000e+00 : f32
    %312 = vector.broadcast %cst_49 : f32 to vector<2x96xf32>
    %313 = arith.addf %312, %311 : vector<2x96xf32>
    %314 = arith.divf %312, %313 : vector<2x96xf32>
    %315 = vector.extract_strided_slice %314 {offsets = [0, 0], sizes = [2, 32], strides = [1, 1]} : vector<2x96xf32> to vector<2x32xf32>
    %316 = vector.extract_strided_slice %314 {offsets = [0, 32], sizes = [2, 32], strides = [1, 1]} : vector<2x96xf32> to vector<2x32xf32>
    %317 = vector.extract_strided_slice %314 {offsets = [0, 64], sizes = [2, 32], strides = [1, 1]} : vector<2x96xf32> to vector<2x32xf32>
    %318 = vector.extract_strided_slice %308 {offsets = [0, 96], sizes = [2, 32], strides = [1, 1]} : vector<2x128xf32> to vector<2x32xf32>
    %319 = math.tanh %318 : vector<2x32xf32>
    %320 = arith.mulf %316, %302 : vector<2x32xf32>
    %321 = arith.mulf %315, %319 : vector<2x32xf32>
    %322 = arith.addf %320, %321 : vector<2x32xf32>
    %323 = math.tanh %322 : vector<2x32xf32>
    %324 = arith.mulf %317, %323 : vector<2x32xf32>
    %c0_50 = arith.constant 0 : index
    %c0_51 = arith.constant 0 : index
    %325 = vector.load %arg9[%c0_50, %c0_51] : memref<32x4xf32, #tpu.memory_space<vmem>>, vector<32x4xf32>
    %cst_52 = arith.constant dense<0.000000e+00> : vector<2x4xf32>
    %326 = tpu.matmul %324, %325, %cst_52 {dimension_numbers = #tpu.dot_dimension_numbers<[1], [0], [0], [1], [0, 0, 1, 1], [], []>} : vector<2x32xf32>, vector<32x4xf32>, vector<2x4xf32> -> vector<2x4xf32>
    %c0_53 = arith.constant 0 : index
    %c0_54 = arith.constant 0 : index
    %327 = vector.load %arg10[%c0_53, %c0_54] : memref<1x4xf32, #tpu.memory_space<vmem>>, vector<1x4xf32>
    %328 = vector.broadcast %327 : vector<1x4xf32> to vector<2x4xf32>
    %329 = arith.addf %326, %328 : vector<2x4xf32>
    %330 = arith.negf %329 : vector<2x4xf32>
    %331 = math.exp %330 : vector<2x4xf32>
    %cst_55 = arith.constant 1.000000e+00 : f32
    %332 = vector.broadcast %cst_55 : f32 to vector<2x4xf32>
    %333 = arith.addf %332, %331 : vector<2x4xf32>
    %334 = arith.divf %332, %333 : vector<2x4xf32>
    %c0_56 = arith.constant 0 : index
    %c0_57 = arith.constant 0 : index
    %335 = vector.load %arg11[%c0_56, %c0_57] : memref<2x4xf32, #tpu.memory_space<vmem>>, vector<2x4xf32>
    tpu.vector_store %arg11[%c0_56, %c0_57], %334 {strides = array<i32>} : memref<2x4xf32, #tpu.memory_space<vmem>>, vector<2x4xf32>,
    return
  }
  func.func @transform_0(%arg0: i32) -> (i32, i32) {
    %c0_i32 = arith.constant 0 : i32
    %c0_i32_0 = arith.constant 0 : i32
    %c0_i32_1 = arith.constant 0 : i32
    return %c0_i32, %c0_i32_0 : i32, i32
  }
  func.func @transform_1(%arg0: i32) -> (i32, i32) {
    %c0_i32 = arith.constant 0 : i32
    %c0_i32_0 = arith.constant 0 : i32
    %c0_i32_1 = arith.constant 0 : i32
    return %c0_i32, %c0_i32_0 : i32, i32
  }
  func.func @transform_2(%arg0: i32) -> (i32, i32) {
    %c0_i32 = arith.constant 0 : i32
    %c0_i32_0 = arith.constant 0 : i32
    %c0_i32_1 = arith.constant 0 : i32
    return %c0_i32, %c0_i32_0 : i32, i32
  }
  func.func @transform_3(%arg0: i32) -> (i32, i32) {
    %c0_i32 = arith.constant 0 : i32
    %c0_i32_0 = arith.constant 0 : i32
    %c0_i32_1 = arith.constant 0 : i32
    return %c0_i32, %c0_i32_0 : i32, i32
  }
  func.func @transform_4(%arg0: i32) -> (i32, i32) {
    %c0_i32 = arith.constant 0 : i32
    %c0_i32_0 = arith.constant 0 : i32
    %c0_i32_1 = arith.constant 0 : i32
    return %c0_i32, %c0_i32_0 : i32, i32
  }
  func.func @transform_5(%arg0: i32) -> (i32, i32) {
    %c0_i32 = arith.constant 0 : i32
    %c0_i32_0 = arith.constant 0 : i32
    %c0_i32_1 = arith.constant 0 : i32
    return %c0_i32, %c0_i32_0 : i32, i32
  }
  func.func @transform_6(%arg0: i32) -> (i32, i32) {
    %c0_i32 = arith.constant 0 : i32
    %c0_i32_0 = arith.constant 0 : i32
    %c0_i32_1 = arith.constant 0 : i32
    return %c0_i32, %c0_i32_0 : i32, i32
  }
  func.func @transform_7(%arg0: i32) -> (i32, i32) {
    %c0_i32 = arith.constant 0 : i32
    %c0_i32_0 = arith.constant 0 : i32
    %c0_i32_1 = arith.constant 0 : i32
    return %c0_i32, %c0_i32_0 : i32, i32
  }
  func.func @transform_8(%arg0: i32) -> (i32, i32) {
    %c0_i32 = arith.constant 0 : i32
    %c0_i32_0 = arith.constant 0 : i32
    %c0_i32_1 = arith.constant 0 : i32
    return %c0_i32, %c0_i32_0 : i32, i32
  }
  func.func @transform_9(%arg0: i32) -> (i32, i32) {
    %c0_i32 = arith.constant 0 : i32
    %c0_i32_0 = arith.constant 0 : i32
    %c0_i32_1 = arith.constant 0 : i32
    return %c0_i32, %c0_i32_0 : i32, i32
  }
  func.func @transform_10(%arg0: i32) -> (i32, i32) {
    %c0_i32 = arith.constant 0 : i32
    %c0_i32_0 = arith.constant 0 : i32
    %c0_i32_1 = arith.constant 0 : i32
    return %c0_i32, %c0_i32_0 : i32, i32
  }
}

</mosaic_0001>

<llo_original>
// kernel: tpu_custom_call.1
$region0: #{tpu_custom_call.1}
  #allocation0 [shape = 'u32[]', space=smem, size = 0x4, offset = 0x4, fixed_abs, tag = 'smem constant byte address 0x4 - core index']
  #allocation1 [shape = 'u32[72,128]{1,0:T(1,128)}', space=vmem, size = 0x9000, scoped, tag = 'internal scratch']
  %s0 = inlined_call_operand.vmem [shape: f32[16,8], index: 0, kind: input, shape index: {}]
  %s1 = inlined_call_operand.vmem [shape: f32[8,128], index: 1, kind: input, shape index: {}]
  %s2 = inlined_call_operand.vmem [shape: f32[1,128], index: 2, kind: input, shape index: {}]
  %s3 = inlined_call_operand.vmem [shape: f32[32,128], index: 3, kind: input, shape index: {}]
  %s4 = inlined_call_operand.hbm [shape: f32[64,128], index: 4, kind: input, shape index: {}]
  %s5 = inlined_call_operand.vmem [shape: f32[1,128], index: 5, kind: input, shape index: {}]
  %s6 = inlined_call_operand.vmem [shape: f32[4,32], index: 6, kind: input, shape index: {}]
  %s7 = inlined_call_operand.vmem [shape: f32[4,32], index: 7, kind: input, shape index: {}]
  %s8 = inlined_call_operand.vmem [shape: f32[32,4], index: 8, kind: input, shape index: {}]
  %s9 = inlined_call_operand.vmem [shape: f32[1,4], index: 9, kind: input, shape index: {}]
  %s10 = inlined_call_operand.hbm [shape: f32[2,4], index: 10, kind: output, shape index: {}]
  %s11 = sld [smem:[#allocation0]]
  $region54: #{tpu_custom_call.1} parent=0
    _
  %s13 = ssub.s32 1, %s11
  %s14 = scalar_select 0, %s13, %s11
  $region1: #{tpu_custom_call.1} parent=0
    #allocation2 [shape = 'u8[32768]{0}', space=vmem, size = 0x8000, scoped, tag = 'input window, operand 4, single buffered']
    #allocation3 [shape = 's32[1]{0}', space=sflag, size = 0x4, scoped, tag = 'scoped memory for tpu_custom_call.1']
    #allocation4 [shape = 's32[1]{0}', space=sflag, size = 0x4, scoped, tag = 'scoped memory for tpu_custom_call.1']
    #allocation5 [shape = 'u8[1024]{0}', space=vmem, size = 0x400, scoped, tag = 'output window, operand 0, single buffered']
    %15 = vsyncpa [#allocation3], 0
    %16 = vsyncpa [#allocation4], 0
    // Predicated region
    $region2: #{tpu_custom_call.1} parent=1 // pred_check
      _
    $region3: #{tpu_custom_call.1} parent=1 // pred_check_branch
      %18 = sbr.rel (0) target = $region5
    $region4: #{tpu_custom_call.1} parent=1 // pred_region
      _
    $region5: #{tpu_custom_call.1} parent=1 // pred_fallthru
      _
    // Predicated region
    $region6: #{tpu_custom_call.1} parent=1 // pred_check
      _
    $region7: #{tpu_custom_call.1} parent=1 // pred_check_branch
      %20 = sbr.rel (0) target = $region9
    $region8: #{tpu_custom_call.1} parent=1 // pred_region
      _
    $region9: #{tpu_custom_call.1} parent=1 // pred_fallthru
      _
    // Predicated region
    $region10: #{tpu_custom_call.1} parent=1 // pred_check
      _
    $region11: #{tpu_custom_call.1} parent=1 // pred_check_branch
      %22 = sbr.rel (0) target = $region13
    $region12: #{tpu_custom_call.1} parent=1 // pred_region
      _
    $region13: #{tpu_custom_call.1} parent=1 // pred_fallthru
      _
    // Predicated region
    $region14: #{tpu_custom_call.1} parent=1 // pred_check
      _
    $region15: #{tpu_custom_call.1} parent=1 // pred_check_branch
      %24 = sbr.rel (0) target = $region17
    $region16: #{tpu_custom_call.1} parent=1 // pred_region
      _
    $region17: #{tpu_custom_call.1} parent=1 // pred_fallthru
      _
    // Predicated region
    $region18: #{tpu_custom_call.1} parent=1 // pred_check
      _
    $region19: #{tpu_custom_call.1} parent=1 // pred_check_branch
      %26 = sbr.rel (0) target = $region21
    $region20: #{tpu_custom_call.1} parent=1 // pred_region
      %28 = vsyncadd [#allocation3], 0
      %s29 = sshll.u32 %s4, 4
      %s30 = int_to_ptr.hbm [resolvable:$true] %s29
      %s31 = sshll.u32 [#allocation2], 4
      %s32 = int_to_ptr.vmem [resolvable:$true] %s31
      %37 = dma.hbm_to_vmem [thread:$0]  %s30, 1024, %s32, [#allocation3], 128, 128, 8
    $region21: #{tpu_custom_call.1} parent=1 // pred_fallthru
      _
    // Predicated region
    $region22: #{tpu_custom_call.1} parent=1 // pred_check
      _
    $region23: #{tpu_custom_call.1} parent=1 // pred_check_branch
      %39 = sbr.rel (0) target = $region25
    $region24: #{tpu_custom_call.1} parent=1 // pred_region
      _
    $region25: #{tpu_custom_call.1} parent=1 // pred_fallthru
      _
    // Predicated region
    $region26: #{tpu_custom_call.1} parent=1 // pred_check
      _
    $region27: #{tpu_custom_call.1} parent=1 // pred_check_branch
      %41 = sbr.rel (0) target = $region29
    $region28: #{tpu_custom_call.1} parent=1 // pred_region
      _
    $region29: #{tpu_custom_call.1} parent=1 // pred_fallthru
      _
    // Predicated region
    $region30: #{tpu_custom_call.1} parent=1 // pred_check
      _
    $region31: #{tpu_custom_call.1} parent=1 // pred_check_branch
      %43 = sbr.rel (0) target = $region33
    $region32: #{tpu_custom_call.1} parent=1 // pred_region
      _
    $region33: #{tpu_custom_call.1} parent=1 // pred_fallthru
      _
    // Predicated region
    $region34: #{tpu_custom_call.1} parent=1 // pred_check
      _
    $region35: #{tpu_custom_call.1} parent=1 // pred_check_branch
      %45 = sbr.rel (0) target = $region37
    $region36: #{tpu_custom_call.1} parent=1 // pred_region
      _
    $region37: #{tpu_custom_call.1} parent=1 // pred_fallthru
      _
    // Predicated region
    $region38: #{tpu_custom_call.1} parent=1 // pred_check
      _
    $region39: #{tpu_custom_call.1} parent=1 // pred_check_branch
      %47 = sbr.rel (0) target = $region41
    $region40: #{tpu_custom_call.1} parent=1 // pred_region
      _
    $region41: #{tpu_custom_call.1} parent=1 // pred_fallthru
      _
    // Predicated region
    $region42: #{tpu_custom_call.1} parent=1 // pred_check
      _
    $region43: #{tpu_custom_call.1} parent=1 // pred_check_branch
      %49 = sbr.rel (0) target = $region45
    $region44: #{tpu_custom_call.1} parent=1 // pred_region
      %51 = dma.done [#allocation3], 1024
    $region45: #{tpu_custom_call.1} parent=1 // pred_fallthru
      _
    %v52 = vld [vmem:[%s0] sm:$0xff]
    %v53 = vld [vmem:[%s0 + $0x8] sm:$0xff]
    %v54 = vld [vmem:[%s1] sm:$0xff]
    %v55 = vld [vmem:[%s2] sm:$0x1]
    %v57 = vperm.slane %v55, 0
    %vm59 = vcmask 64512
    %v61 = vsel %vm59, %v52, 0
    %v64 = vsel %vm59, %v53, 0
    %66 = vmatpush.msra.mxu0 0.0
    %67 = vmatpush.msra.mxu0 0.0
    %68 = vmatpush.msra.mxu0 0.0
    %69 = vmatpush.msra.mxu0 0.0
    %70 = vmatpush.msra.mxu0 0.0
    %71 = vmatpush.msra.mxu0 0.0
    %72 = vmatpush.msra.mxu0 0.0
    %73 = vmatpush.msra.mxu0 0.0
    %74 = vmatpush.msra.mxu0 0.0
    %75 = vmatpush.msra.mxu0 0.0
    %76 = vmatpush.msra.mxu0 0.0
    %77 = vmatpush.msra.mxu0 0.0
    %78 = vmatpush.msra.mxu0 0.0
    %79 = vmatpush.msra.mxu0 0.0
    %80 = vmatpush.msra.mxu0 0.0
    %81 = vmatpush.msra.mxu0 %v54
    %82 = vmatmul.f32.gmra.mxu0 %v61
    %v83 = vpop.f32.mrf.mxu0
    %v84 = vadd.f32 %v57, %v83
    %85 = vmatmul.f32.gmra.mxu0 %v64
    %v86 = vpop.f32.mrf.mxu0
    %v87 = vadd.f32 %v57, %v86
    %88 = vdwg.mxu0
    %v89 = vld [vmem:[%s3] sm:$0xff]
    %v90 = vld [vmem:[%s3 + $0x8] sm:$0xff]
    %v91 = vld [vmem:[%s3 + $0x10] sm:$0xff]
    %v92 = vld [vmem:[%s3 + $0x18] sm:$0xff]
    %v93 = vld [vmem:[#allocation2] sm:$0xff]
    %v94 = vld [vmem:[#allocation2 + $0x8] sm:$0xff]
    %v95 = vld [vmem:[#allocation2 + $0x10] sm:$0xff]
    %v96 = vld [vmem:[#allocation2 + $0x18] sm:$0xff]
    %v97 = vld [vmem:[#allocation2 + $0x20] sm:$0xff]
    %v98 = vld [vmem:[#allocation2 + $0x28] sm:$0xff]
    %v99 = vld [vmem:[#allocation2 + $0x30] sm:$0xff]
    %v100 = vld [vmem:[#allocation2 + $0x38] sm:$0xff]
    %v101 = vld [vmem:[%s5] sm:$0x1]
    %v102 = vld [vmem:[%s6] sm:$0x3]
    %v103 = vld [vmem:[%s6 + $0x2] sm:$0x3]
    %v104 = vld [vmem:[%s7] sm:$0x3]
    %v105 = vld [vmem:[%s7 + $0x2] sm:$0x3]
    %vm106 = vcmask 261120
    %v108 = vsel %vm106, %v102, 0
    %110 = vmatpush.msra.mxu0 0.0
    %111 = vmatpush.msra.mxu0 0.0
    %112 = vmatpush.msra.mxu0 0.0
    %113 = vmatpush.msra.mxu0 0.0
    %114 = vmatpush.msra.mxu0 0.0
    %115 = vmatpush.msra.mxu0 0.0
    %116 = vmatpush.msra.mxu0 0.0
    %117 = vmatpush.msra.mxu0 0.0
    %118 = vmatpush.msra.mxu0 0.0
    %119 = vmatpush.msra.mxu0 0.0
    %120 = vmatpush.msra.mxu0 0.0
    %121 = vmatpush.msra.mxu0 0.0
    %122 = vmatpush.msra.mxu0 %v92
    %123 = vmatpush.msra.mxu0 %v91
    %124 = vmatpush.msra.mxu0 %v90
    %125 = vmatpush.msra.mxu0 %v89
    %126 = vmatmul.f32.gmra.mxu0 %v108
    %v127 = vpop.f32.mrf.mxu0
    %v128 = vadd.f32 0.0, %v127
    %129 = vdwg.mxu0
    %v130 = vadd.f32 %v84, %v128
    %v131 = vxor.u32 %v130, 2147483648
    %v132 = vmul.f32 %v131, 1.442695
    %v133 = vpow.pop %v132
    %v134 = vadd.f32 %v133, 1.0
    %v135 = vrcp.pop %v134
    %v136 = vmul.f32 %v134, %v135
    %v137 = vsub.f32 1.0, %v136
    %v138 = vmul.f32 %v135, %v137
    %v139 = vadd.f32 %v135, %v138
    %vm140 = vweird.f32 %v134
    %vm141 = vweird.f32 %v135
    %vm142 = vmor %vm140, %vm141
    %v143 = vsel %vm142, %v135, %v139
    %v144 = vand.u32 2147483647, %v134
    %vm145 = vcmp.eq.f32.partialorder %v144, 8.507059e+37
    %v146 = vand.u32 %v134, 2147483648
    %v147 = vor.u32 1.1754944e-38, %v146
    %v148 = vsel %vm145, %v147, %v143
    %v149 = vmul.f32 1.0, %v148
    %v150 = vtanh.pop %v130
    %152 = vrot.lane.b32.xlu0 %v104, 32
    %v153 = vpop.permute.xlu0 %152
    %v155 = vmul.f32 %v149, %v153
    %157 = vrot.lane.b32.xlu0 %v150, 32
    %v158 = vpop.permute.xlu0 %157
    %v160 = vmul.f32 %v149, %v158
    %162 = vrot.lane.b32.xlu0 %v160, 32
    %v163 = vpop.permute.xlu0 %162
    %v165 = vadd.f32 %v155, %v163
    %v166 = vtanh.pop %v165
    %168 = vrot.lane.b32.xlu0 %v166, 32
    %v169 = vpop.permute.xlu0 %168
    %v171 = vmul.f32 %v149, %v169
    %173 = vrot.lane.b32.xlu0 %v171, 64
    %v174 = vpop.permute.xlu0 %173
    %v175 = vsel %vm106, %v174, 0
    %177 = vmatpush.msra.mxu0 0.0
    %178 = vmatpush.msra.mxu0 0.0
    %179 = vmatpush.msra.mxu0 0.0
    %180 = vmatpush.msra.mxu0 0.0
    %181 = vmatpush.msra.mxu0 0.0
    %182 = vmatpush.msra.mxu0 0.0
    %183 = vmatpush.msra.mxu0 0.0
    %184 = vmatpush.msra.mxu0 0.0
    %185 = vmatpush.msra.mxu0 0.0
    %186 = vmatpush.msra.mxu0 0.0
    %187 = vmatpush.msra.mxu0 0.0
    %188 = vmatpush.msra.mxu0 0.0
    %189 = vmatpush.msra.mxu0 %v92
    %190 = vmatpush.msra.mxu0 %v91
    %191 = vmatpush.msra.mxu0 %v90
    %192 = vmatpush.msra.mxu0 %v89
    %193 = vmatmul.f32.gmra.mxu0 %v175
    %v194 = vpop.f32.mrf.mxu0
    %v195 = vadd.f32 0.0, %v194
    %196 = vdwg.mxu0
    %v198 = vrot.slane %v195, 6
    %v200 = vadd.f32 %v84, %v198
    %v201 = vxor.u32 %v200, 2147483648
    %v202 = vmul.f32 %v201, 1.442695
    %v203 = vpow.pop %v202
    %v204 = vadd.f32 %v203, 1.0
    %v205 = vrcp.pop %v204
    %v206 = vmul.f32 %v204, %v205
    %v207 = vsub.f32 1.0, %v206
    %v208 = vmul.f32 %v205, %v207
    %v209 = vadd.f32 %v205, %v208
    %vm210 = vweird.f32 %v204
    %vm211 = vweird.f32 %v205
    %vm212 = vmor %vm210, %vm211
    %v213 = vsel %vm212, %v205, %v209
    %v214 = vand.u32 2147483647, %v204
    %vm215 = vcmp.eq.f32.partialorder %v214, 8.507059e+37
    %v216 = vand.u32 %v204, 2147483648
    %v217 = vor.u32 1.1754944e-38, %v216
    %v218 = vsel %vm215, %v217, %v213
    %v219 = vmul.f32 1.0, %v218
    %v220 = vtanh.pop %v200
    %v222 = vrot.slane %v165, 6
    %v224 = vmul.f32 %v219, %v222
    %226 = vrot.lane.b32.xlu0 %v220, 32
    %v227 = vpop.permute.xlu0 %226
    %v229 = vmul.f32 %v219, %v227
    %231 = vrot.lane.b32.xlu0 %v229, 32
    %v232 = vpop.permute.xlu0 %231
    %v234 = vadd.f32 %v224, %v232
    %v235 = vtanh.pop %v234
    %237 = vrot.lane.b32.xlu0 %v235, 32
    %v238 = vpop.permute.xlu0 %237
    %v240 = vmul.f32 %v219, %v238
    %243 = vrot.lane.b32.xlu0 %v103, 32
    %v244 = vpop.permute.xlu0 %243
    %v246 = vsel %vm106, %v174, %v244
    %v248 = vperm.slane %v101, 0
    %vm250 = vcmask 523264
    %v252 = vsel %vm250, %v246, 0
    %254 = vmatpush.msra.mxu0 0.0
    %255 = vmatpush.msra.mxu0 0.0
    %256 = vmatpush.msra.mxu0 0.0
    %257 = vmatpush.msra.mxu0 0.0
    %258 = vmatpush.msra.mxu0 0.0
    %259 = vmatpush.msra.mxu0 0.0
    %260 = vmatpush.msra.mxu0 0.0
    %261 = vmatpush.msra.mxu0 0.0
    %262 = vmatpush.msra.mxu0 %v100
    %263 = vmatpush.msra.mxu0 %v99
    %264 = vmatpush.msra.mxu0 %v98
    %265 = vmatpush.msra.mxu0 %v97
    %266 = vmatpush.msra.mxu0 %v96
    %267 = vmatpush.msra.mxu0 %v95
    %268 = vmatpush.msra.mxu0 %v94
    %269 = vmatpush.msra.mxu0 %v93
    %270 = vmatmul.f32.gmra.mxu0 %v252
    %v271 = vpop.f32.mrf.mxu0
    %v272 = vadd.f32 %v248, %v271
    %273 = vdwg.mxu0
    %v274 = vxor.u32 %v272, 2147483648
    %v275 = vmul.f32 %v274, 1.442695
    %v276 = vpow.pop %v275
    %v277 = vadd.f32 %v276, 1.0
    %v278 = vrcp.pop %v277
    %v279 = vmul.f32 %v277, %v278
    %v280 = vsub.f32 1.0, %v279
    %v281 = vmul.f32 %v278, %v280
    %v282 = vadd.f32 %v278, %v281
    %vm283 = vweird.f32 %v277
    %vm284 = vweird.f32 %v278
    %vm285 = vmor %vm283, %vm284
    %v286 = vsel %vm285, %v278, %v282
    %v287 = vand.u32 2147483647, %v277
    %vm288 = vcmp.eq.f32.partialorder %v287, 8.507059e+37
    %v289 = vand.u32 %v277, 2147483648
    %v290 = vor.u32 1.1754944e-38, %v289
    %v291 = vsel %vm288, %v290, %v286
    %v292 = vmul.f32 1.0, %v291
    %v293 = vtanh.pop %v272
    %295 = vrot.lane.b32.xlu0 %v105, 32
    %v296 = vpop.permute.xlu0 %295
    %v298 = vmul.f32 %v292, %v296
    %300 = vrot.lane.b32.xlu0 %v293, 32
    %v301 = vpop.permute.xlu0 %300
    %v303 = vmul.f32 %v292, %v301
    %305 = vrot.lane.b32.xlu0 %v303, 32
    %v306 = vpop.permute.xlu0 %305
    %v308 = vadd.f32 %v298, %v306
    %v309 = vtanh.pop %v308
    %311 = vrot.lane.b32.xlu0 %v309, 32
    %v312 = vpop.permute.xlu0 %311
    %v314 = vmul.f32 %v292, %v312
    %v316 = vrot.slane %v240, 2
    %317 = vrot.lane.b32.xlu0 %v316, 64
    %v318 = vpop.permute.xlu0 %317
    %v319 = vsel %vm106, %v318, 0
    %321 = vmatpush.msra.mxu0 0.0
    %322 = vmatpush.msra.mxu0 0.0
    %323 = vmatpush.msra.mxu0 0.0
    %324 = vmatpush.msra.mxu0 0.0
    %325 = vmatpush.msra.mxu0 0.0
    %326 = vmatpush.msra.mxu0 0.0
    %327 = vmatpush.msra.mxu0 0.0
    %328 = vmatpush.msra.mxu0 0.0
    %329 = vmatpush.msra.mxu0 0.0
    %330 = vmatpush.msra.mxu0 0.0
    %331 = vmatpush.msra.mxu0 0.0
    %332 = vmatpush.msra.mxu0 0.0
    %333 = vmatpush.msra.mxu0 %v92
    %334 = vmatpush.msra.mxu0 %v91
    %335 = vmatpush.msra.mxu0 %v90
    %336 = vmatpush.msra.mxu0 %v89
    %337 = vmatmul.f32.gmra.mxu0 %v319
    %v338 = vpop.f32.mrf.mxu0
    %v339 = vadd.f32 0.0, %v338
    %340 = vdwg.mxu0
    %v342 = vrot.slane %v339, 4
    %v344 = vadd.f32 %v84, %v342
    %v345 = vxor.u32 %v344, 2147483648
    %v346 = vmul.f32 %v345, 1.442695
    %v347 = vpow.pop %v346
    %v348 = vadd.f32 %v347, 1.0
    %v349 = vrcp.pop %v348
    %v350 = vmul.f32 %v348, %v349
    %v351 = vsub.f32 1.0, %v350
    %v352 = vmul.f32 %v349, %v351
    %v353 = vadd.f32 %v349, %v352
    %vm354 = vweird.f32 %v348
    %vm355 = vweird.f32 %v349
    %vm356 = vmor %vm354, %vm355
    %v357 = vsel %vm356, %v349, %v353
    %v358 = vand.u32 2147483647, %v348
    %vm359 = vcmp.eq.f32.partialorder %v358, 8.507059e+37
    %v360 = vand.u32 %v348, 2147483648
    %v361 = vor.u32 1.1754944e-38, %v360
    %v362 = vsel %vm359, %v361, %v357
    %v363 = vmul.f32 1.0, %v362
    %v364 = vtanh.pop %v344
    %v366 = vrot.slane %v234, 6
    %v368 = vmul.f32 %v363, %v366
    %370 = vrot.lane.b32.xlu0 %v364, 32
    %v371 = vpop.permute.xlu0 %370
    %v373 = vmul.f32 %v363, %v371
    %375 = vrot.lane.b32.xlu0 %v373, 32
    %v376 = vpop.permute.xlu0 %375
    %v378 = vadd.f32 %v368, %v376
    %v379 = vtanh.pop %v378
    %381 = vrot.lane.b32.xlu0 %v379, 32
    %v382 = vpop.permute.xlu0 %381
    %v384 = vmul.f32 %v363, %v382
    %385 = vrot.lane.b32.xlu0 %v240, 64
    %v386 = vpop.permute.xlu0 %385
    %v389 = vrot.slane %v314, 6
    %390 = vrot.lane.b32.xlu0 %v389, 96
    %v391 = vpop.permute.xlu0 %390
    %v393 = vsel %vm106, %v386, %v391
    %v395 = vrot.slane %v393, 2
    %v396 = vsel %vm250, %v395, 0
    %398 = vmatpush.msra.mxu0 0.0
    %399 = vmatpush.msra.mxu0 0.0
    %400 = vmatpush.msra.mxu0 0.0
    %401 = vmatpush.msra.mxu0 0.0
    %402 = vmatpush.msra.mxu0 0.0
    %403 = vmatpush.msra.mxu0 0.0
    %404 = vmatpush.msra.mxu0 0.0
    %405 = vmatpush.msra.mxu0 0.0
    %406 = vmatpush.msra.mxu0 %v100
    %407 = vmatpush.msra.mxu0 %v99
    %408 = vmatpush.msra.mxu0 %v98
    %409 = vmatpush.msra.mxu0 %v97
    %410 = vmatpush.msra.mxu0 %v96
    %411 = vmatpush.msra.mxu0 %v95
    %412 = vmatpush.msra.mxu0 %v94
    %413 = vmatpush.msra.mxu0 %v93
    %414 = vmatmul.f32.gmra.mxu0 %v396
    %v415 = vpop.f32.mrf.mxu0
    %v416 = vadd.f32 %v248, %v415
    %417 = vdwg.mxu0
    %v418 = vxor.u32 %v416, 2147483648
    %v419 = vmul.f32 %v418, 1.442695
    %v420 = vpow.pop %v419
    %v421 = vadd.f32 %v420, 1.0
    %v422 = vrcp.pop %v421
    %v423 = vmul.f32 %v421, %v422
    %v424 = vsub.f32 1.0, %v423
    %v425 = vmul.f32 %v422, %v424
    %v426 = vadd.f32 %v422, %v425
    %vm427 = vweird.f32 %v421
    %vm428 = vweird.f32 %v422
    %vm429 = vmor %vm427, %vm428
    %v430 = vsel %vm429, %v422, %v426
    %v431 = vand.u32 2147483647, %v421
    %vm432 = vcmp.eq.f32.partialorder %v431, 8.507059e+37
    %v433 = vand.u32 %v421, 2147483648
    %v434 = vor.u32 1.1754944e-38, %v433
    %v435 = vsel %vm432, %v434, %v430
    %v436 = vmul.f32 1.0, %v435
    %v437 = vtanh.pop %v416
    %v438 = vmul.f32 %v436, %v308
    %440 = vrot.lane.b32.xlu0 %v437, 32
    %v441 = vpop.permute.xlu0 %440
    %v443 = vmul.f32 %v436, %v441
    %445 = vrot.lane.b32.xlu0 %v443, 32
    %v446 = vpop.permute.xlu0 %445
    %v448 = vadd.f32 %v438, %v446
    %v449 = vtanh.pop %v448
    %451 = vrot.lane.b32.xlu0 %v449, 32
    %v452 = vpop.permute.xlu0 %451
    %v454 = vmul.f32 %v436, %v452
    %v456 = vrot.slane %v384, 4
    %457 = vrot.lane.b32.xlu0 %v456, 64
    %v458 = vpop.permute.xlu0 %457
    %v459 = vsel %vm106, %v458, 0
    %461 = vmatpush.msra.mxu0 0.0
    %462 = vmatpush.msra.mxu0 0.0
    %463 = vmatpush.msra.mxu0 0.0
    %464 = vmatpush.msra.mxu0 0.0
    %465 = vmatpush.msra.mxu0 0.0
    %466 = vmatpush.msra.mxu0 0.0
    %467 = vmatpush.msra.mxu0 0.0
    %468 = vmatpush.msra.mxu0 0.0
    %469 = vmatpush.msra.mxu0 0.0
    %470 = vmatpush.msra.mxu0 0.0
    %471 = vmatpush.msra.mxu0 0.0
    %472 = vmatpush.msra.mxu0 0.0
    %473 = vmatpush.msra.mxu0 %v92
    %474 = vmatpush.msra.mxu0 %v91
    %475 = vmatpush.msra.mxu0 %v90
    %476 = vmatpush.msra.mxu0 %v89
    %477 = vmatmul.f32.gmra.mxu0 %v459
    %v478 = vpop.f32.mrf.mxu0
    %v479 = vadd.f32 0.0, %v478
    %480 = vdwg.mxu0
    %v482 = vrot.slane %v479, 2
    %v484 = vadd.f32 %v84, %v482
    %v485 = vxor.u32 %v484, 2147483648
    %v486 = vmul.f32 %v485, 1.442695
    %v487 = vpow.pop %v486
    %v488 = vadd.f32 %v487, 1.0
    %v489 = vrcp.pop %v488
    %v490 = vmul.f32 %v488, %v489
    %v491 = vsub.f32 1.0, %v490
    %v492 = vmul.f32 %v489, %v491
    %v493 = vadd.f32 %v489, %v492
    %vm494 = vweird.f32 %v488
    %vm495 = vweird.f32 %v489
    %vm496 = vmor %vm494, %vm495
    %v497 = vsel %vm496, %v489, %v493
    %v498 = vand.u32 2147483647, %v488
    %vm499 = vcmp.eq.f32.partialorder %v498, 8.507059e+37
    %v500 = vand.u32 %v488, 2147483648
    %v501 = vor.u32 1.1754944e-38, %v500
    %v502 = vsel %vm499, %v501, %v497
    %v503 = vmul.f32 1.0, %v502
    %v504 = vtanh.pop %v484
    %v506 = vrot.slane %v378, 6
    %v508 = vmul.f32 %v503, %v506
    %510 = vrot.lane.b32.xlu0 %v504, 32
    %v511 = vpop.permute.xlu0 %510
    %v513 = vmul.f32 %v503, %v511
    %515 = vrot.lane.b32.xlu0 %v513, 32
    %v516 = vpop.permute.xlu0 %515
    %v518 = vadd.f32 %v508, %v516
    %v519 = vtanh.pop %v518
    %521 = vrot.lane.b32.xlu0 %v519, 32
    %v522 = vpop.permute.xlu0 %521
    %v524 = vmul.f32 %v503, %v522
    %525 = vrot.lane.b32.xlu0 %v384, 64
    %v526 = vpop.permute.xlu0 %525
    %v529 = vrot.slane %v454, 4
    %530 = vrot.lane.b32.xlu0 %v529, 96
    %v531 = vpop.permute.xlu0 %530
    %v533 = vsel %vm106, %v526, %v531
    %v535 = vrot.slane %v533, 4
    %v536 = vsel %vm250, %v535, 0
    %538 = vmatpush.msra.mxu0 0.0
    %539 = vmatpush.msra.mxu0 0.0
    %540 = vmatpush.msra.mxu0 0.0
    %541 = vmatpush.msra.mxu0 0.0
    %542 = vmatpush.msra.mxu0 0.0
    %543 = vmatpush.msra.mxu0 0.0
    %544 = vmatpush.msra.mxu0 0.0
    %545 = vmatpush.msra.mxu0 0.0
    %546 = vmatpush.msra.mxu0 %v100
    %547 = vmatpush.msra.mxu0 %v99
    %548 = vmatpush.msra.mxu0 %v98
    %549 = vmatpush.msra.mxu0 %v97
    %550 = vmatpush.msra.mxu0 %v96
    %551 = vmatpush.msra.mxu0 %v95
    %552 = vmatpush.msra.mxu0 %v94
    %553 = vmatpush.msra.mxu0 %v93
    %554 = vmatmul.f32.gmra.mxu0 %v536
    %v555 = vpop.f32.mrf.mxu0
    %v556 = vadd.f32 %v248, %v555
    %557 = vdwg.mxu0
    %v558 = vxor.u32 %v556, 2147483648
    %v559 = vmul.f32 %v558, 1.442695
    %v560 = vpow.pop %v559
    %v561 = vadd.f32 %v560, 1.0
    %v562 = vrcp.pop %v561
    %v563 = vmul.f32 %v561, %v562
    %v564 = vsub.f32 1.0, %v563
    %v565 = vmul.f32 %v562, %v564
    %v566 = vadd.f32 %v562, %v565
    %vm567 = vweird.f32 %v561
    %vm568 = vweird.f32 %v562
    %vm569 = vmor %vm567, %vm568
    %v570 = vsel %vm569, %v562, %v566
    %v571 = vand.u32 2147483647, %v561
    %vm572 = vcmp.eq.f32.partialorder %v571, 8.507059e+37
    %v573 = vand.u32 %v561, 2147483648
    %v574 = vor.u32 1.1754944e-38, %v573
    %v575 = vsel %vm572, %v574, %v570
    %v576 = vmul.f32 1.0, %v575
    %v577 = vtanh.pop %v556
    %v578 = vmul.f32 %v576, %v448
    %580 = vrot.lane.b32.xlu0 %v577, 32
    %v581 = vpop.permute.xlu0 %580
    %v583 = vmul.f32 %v576, %v581
    %585 = vrot.lane.b32.xlu0 %v583, 32
    %v586 = vpop.permute.xlu0 %585
    %v588 = vadd.f32 %v578, %v586
    %v589 = vtanh.pop %v588
    %591 = vrot.lane.b32.xlu0 %v589, 32
    %v592 = vpop.permute.xlu0 %591
    %v594 = vmul.f32 %v576, %v592
    %v596 = vrot.slane %v524, 6
    %597 = vrot.lane.b32.xlu0 %v596, 64
    %v598 = vpop.permute.xlu0 %597
    %v599 = vsel %vm106, %v598, 0
    %601 = vmatpush.msra.mxu0 0.0
    %602 = vmatpush.msra.mxu0 0.0
    %603 = vmatpush.msra.mxu0 0.0
    %604 = vmatpush.msra.mxu0 0.0
    %605 = vmatpush.msra.mxu0 0.0
    %606 = vmatpush.msra.mxu0 0.0
    %607 = vmatpush.msra.mxu0 0.0
    %608 = vmatpush.msra.mxu0 0.0
    %609 = vmatpush.msra.mxu0 0.0
    %610 = vmatpush.msra.mxu0 0.0
    %611 = vmatpush.msra.mxu0 0.0
    %612 = vmatpush.msra.mxu0 0.0
    %613 = vmatpush.msra.mxu0 %v92
    %614 = vmatpush.msra.mxu0 %v91
    %615 = vmatpush.msra.mxu0 %v90
    %616 = vmatpush.msra.mxu0 %v89
    %617 = vmatmul.f32.gmra.mxu0 %v599
    %v618 = vpop.f32.mrf.mxu0
    %v619 = vadd.f32 0.0, %v618
    %620 = vdwg.mxu0
    %v621 = vadd.f32 %v87, %v619
    %v622 = vxor.u32 %v621, 2147483648
    %v623 = vmul.f32 %v622, 1.442695
    %v624 = vpow.pop %v623
    %v625 = vadd.f32 %v624, 1.0
    %v626 = vrcp.pop %v625
    %v627 = vmul.f32 %v625, %v626
    %v628 = vsub.f32 1.0, %v627
    %v629 = vmul.f32 %v626, %v628
    %v630 = vadd.f32 %v626, %v629
    %vm631 = vweird.f32 %v625
    %vm632 = vweird.f32 %v626
    %vm633 = vmor %vm631, %vm632
    %v634 = vsel %vm633, %v626, %v630
    %v635 = vand.u32 2147483647, %v625
    %vm636 = vcmp.eq.f32.partialorder %v635, 8.507059e+37
    %v637 = vand.u32 %v625, 2147483648
    %v638 = vor.u32 1.1754944e-38, %v637
    %v639 = vsel %vm636, %v638, %v634
    %v640 = vmul.f32 1.0, %v639
    %v641 = vtanh.pop %v621
    %v643 = vrot.slane %v518, 6
    %v645 = vmul.f32 %v640, %v643
    %647 = vrot.lane.b32.xlu0 %v641, 32
    %v648 = vpop.permute.xlu0 %647
    %v650 = vmul.f32 %v640, %v648
    %652 = vrot.lane.b32.xlu0 %v650, 32
    %v653 = vpop.permute.xlu0 %652
    %v655 = vadd.f32 %v645, %v653
    %v656 = vtanh.pop %v655
    %658 = vrot.lane.b32.xlu0 %v656, 32
    %v659 = vpop.permute.xlu0 %658
    %v661 = vmul.f32 %v640, %v659
    %662 = vrot.lane.b32.xlu0 %v524, 64
    %v663 = vpop.permute.xlu0 %662
    %v666 = vrot.slane %v594, 2
    %667 = vrot.lane.b32.xlu0 %v666, 96
    %v668 = vpop.permute.xlu0 %667
    %v670 = vsel %vm106, %v663, %v668
    %v672 = vrot.slane %v670, 6
    %v673 = vsel %vm250, %v672, 0
    %675 = vmatpush.msra.mxu0 0.0
    %676 = vmatpush.msra.mxu0 0.0
    %677 = vmatpush.msra.mxu0 0.0
    %678 = vmatpush.msra.mxu0 0.0
    %679 = vmatpush.msra.mxu0 0.0
    %680 = vmatpush.msra.mxu0 0.0
    %681 = vmatpush.msra.mxu0 0.0
    %682 = vmatpush.msra.mxu0 0.0
    %683 = vmatpush.msra.mxu0 %v100
    %684 = vmatpush.msra.mxu0 %v99
    %685 = vmatpush.msra.mxu0 %v98
    %686 = vmatpush.msra.mxu0 %v97
    %687 = vmatpush.msra.mxu0 %v96
    %688 = vmatpush.msra.mxu0 %v95
    %689 = vmatpush.msra.mxu0 %v94
    %690 = vmatpush.msra.mxu0 %v93
    %691 = vmatmul.f32.gmra.mxu0 %v673
    %v692 = vpop.f32.mrf.mxu0
    %v693 = vadd.f32 %v248, %v692
    %694 = vdwg.mxu0
    %v695 = vxor.u32 %v693, 2147483648
    %v696 = vmul.f32 %v695, 1.442695
    %v697 = vpow.pop %v696
    %v698 = vadd.f32 %v697, 1.0
    %v699 = vrcp.pop %v698
    %v700 = vmul.f32 %v698, %v699
    %v701 = vsub.f32 1.0, %v700
    %v702 = vmul.f32 %v699, %v701
    %v703 = vadd.f32 %v699, %v702
    %vm704 = vweird.f32 %v698
    %vm705 = vweird.f32 %v699
    %vm706 = vmor %vm704, %vm705
    %v707 = vsel %vm706, %v699, %v703
    %v708 = vand.u32 2147483647, %v698
    %vm709 = vcmp.eq.f32.partialorder %v708, 8.507059e+37
    %v710 = vand.u32 %v698, 2147483648
    %v711 = vor.u32 1.1754944e-38, %v710
    %v712 = vsel %vm709, %v711, %v707
    %v713 = vmul.f32 1.0, %v712
    %v714 = vtanh.pop %v693
    %v715 = vmul.f32 %v713, %v588
    %717 = vrot.lane.b32.xlu0 %v714, 32
    %v718 = vpop.permute.xlu0 %717
    %v720 = vmul.f32 %v713, %v718
    %722 = vrot.lane.b32.xlu0 %v720, 32
    %v723 = vpop.permute.xlu0 %722
    %v725 = vadd.f32 %v715, %v723
    %v726 = vtanh.pop %v725
    %728 = vrot.lane.b32.xlu0 %v726, 32
    %v729 = vpop.permute.xlu0 %728
    %v731 = vmul.f32 %v713, %v729
    %733 = vrot.lane.b32.xlu0 %v661, 64
    %v734 = vpop.permute.xlu0 %733
    %v735 = vsel %vm106, %v734, 0
    %737 = vmatpush.msra.mxu0 0.0
    %738 = vmatpush.msra.mxu0 0.0
    %739 = vmatpush.msra.mxu0 0.0
    %740 = vmatpush.msra.mxu0 0.0
    %741 = vmatpush.msra.mxu0 0.0
    %742 = vmatpush.msra.mxu0 0.0
    %743 = vmatpush.msra.mxu0 0.0
    %744 = vmatpush.msra.mxu0 0.0
    %745 = vmatpush.msra.mxu0 0.0
    %746 = vmatpush.msra.mxu0 0.0
    %747 = vmatpush.msra.mxu0 0.0
    %748 = vmatpush.msra.mxu0 0.0
    %749 = vmatpush.msra.mxu0 %v92
    %750 = vmatpush.msra.mxu0 %v91
    %751 = vmatpush.msra.mxu0 %v90
    %752 = vmatpush.msra.mxu0 %v89
    %753 = vmatmul.f32.gmra.mxu0 %v735
    %v754 = vpop.f32.mrf.mxu0
    %v755 = vadd.f32 0.0, %v754
    %756 = vdwg.mxu0
    %v758 = vrot.slane %v755, 6
    %v760 = vadd.f32 %v87, %v758
    %v761 = vxor.u32 %v760, 2147483648
    %v762 = vmul.f32 %v761, 1.442695
    %v763 = vpow.pop %v762
    %v764 = vadd.f32 %v763, 1.0
    %v765 = vrcp.pop %v764
    %v766 = vmul.f32 %v764, %v765
    %v767 = vsub.f32 1.0, %v766
    %v768 = vmul.f32 %v765, %v767
    %v769 = vadd.f32 %v765, %v768
    %vm770 = vweird.f32 %v764
    %vm771 = vweird.f32 %v765
    %vm772 = vmor %vm770, %vm771
    %v773 = vsel %vm772, %v765, %v769
    %v774 = vand.u32 2147483647, %v764
    %vm775 = vcmp.eq.f32.partialorder %v774, 8.507059e+37
    %v776 = vand.u32 %v764, 2147483648
    %v777 = vor.u32 1.1754944e-38, %v776
    %v778 = vsel %vm775, %v777, %v773
    %v779 = vmul.f32 1.0, %v778
    %v780 = vtanh.pop %v760
    %v782 = vrot.slane %v655, 6
    %v784 = vmul.f32 %v779, %v782
    %786 = vrot.lane.b32.xlu0 %v780, 32
    %v787 = vpop.permute.xlu0 %786
    %v789 = vmul.f32 %v779, %v787
    %791 = vrot.lane.b32.xlu0 %v789, 32
    %v792 = vpop.permute.xlu0 %791
    %v794 = vadd.f32 %v784, %v792
    %v795 = vtanh.pop %v794
    %797 = vrot.lane.b32.xlu0 %v795, 32
    %v798 = vpop.permute.xlu0 %797
    %v800 = vmul.f32 %v779, %v798
    %803 = vrot.lane.b32.xlu0 %v731, 96
    %v804 = vpop.permute.xlu0 %803
    %v806 = vsel %vm106, %v734, %v804
    %v808 = vsel %vm250, %v806, 0
    %810 = vmatpush.msra.mxu0 0.0
    %811 = vmatpush.msra.mxu0 0.0
    %812 = vmatpush.msra.mxu0 0.0
    %813 = vmatpush.msra.mxu0 0.0
    %814 = vmatpush.msra.mxu0 0.0
    %815 = vmatpush.msra.mxu0 0.0
    %816 = vmatpush.msra.mxu0 0.0
    %817 = vmatpush.msra.mxu0 0.0
    %818 = vmatpush.msra.mxu0 %v100
    %819 = vmatpush.msra.mxu0 %v99
    %820 = vmatpush.msra.mxu0 %v98
    %821 = vmatpush.msra.mxu0 %v97
    %822 = vmatpush.msra.mxu0 %v96
    %823 = vmatpush.msra.mxu0 %v95
    %824 = vmatpush.msra.mxu0 %v94
    %825 = vmatpush.msra.mxu0 %v93
    %826 = vmatmul.f32.gmra.mxu0 %v808
    %v827 = vpop.f32.mrf.mxu0
    %v828 = vadd.f32 %v248, %v827
    %829 = vdwg.mxu0
    %v830 = vxor.u32 %v828, 2147483648
    %v831 = vmul.f32 %v830, 1.442695
    %v832 = vpow.pop %v831
    %v833 = vadd.f32 %v832, 1.0
    %v834 = vrcp.pop %v833
    %v835 = vmul.f32 %v833, %v834
    %v836 = vsub.f32 1.0, %v835
    %v837 = vmul.f32 %v834, %v836
    %v838 = vadd.f32 %v834, %v837
    %vm839 = vweird.f32 %v833
    %vm840 = vweird.f32 %v834
    %vm841 = vmor %vm839, %vm840
    %v842 = vsel %vm841, %v834, %v838
    %v843 = vand.u32 2147483647, %v833
    %vm844 = vcmp.eq.f32.partialorder %v843, 8.507059e+37
    %v845 = vand.u32 %v833, 2147483648
    %v846 = vor.u32 1.1754944e-38, %v845
    %v847 = vsel %vm844, %v846, %v842
    %v848 = vmul.f32 1.0, %v847
    %v849 = vtanh.pop %v828
    %v850 = vmul.f32 %v848, %v725
    %852 = vrot.lane.b32.xlu0 %v849, 32
    %v853 = vpop.permute.xlu0 %852
    %v855 = vmul.f32 %v848, %v853
    %857 = vrot.lane.b32.xlu0 %v855, 32
    %v858 = vpop.permute.xlu0 %857
    %v860 = vadd.f32 %v850, %v858
    %v861 = vtanh.pop %v860
    %863 = vrot.lane.b32.xlu0 %v861, 32
    %v864 = vpop.permute.xlu0 %863
    %v866 = vmul.f32 %v848, %v864
    %v868 = vrot.slane %v800, 2
    %869 = vrot.lane.b32.xlu0 %v868, 64
    %v870 = vpop.permute.xlu0 %869
    %v871 = vsel %vm106, %v870, 0
    %873 = vmatpush.msra.mxu0 0.0
    %874 = vmatpush.msra.mxu0 0.0
    %875 = vmatpush.msra.mxu0 0.0
    %876 = vmatpush.msra.mxu0 0.0
    %877 = vmatpush.msra.mxu0 0.0
    %878 = vmatpush.msra.mxu0 0.0
    %879 = vmatpush.msra.mxu0 0.0
    %880 = vmatpush.msra.mxu0 0.0
    %881 = vmatpush.msra.mxu0 0.0
    %882 = vmatpush.msra.mxu0 0.0
    %883 = vmatpush.msra.mxu0 0.0
    %884 = vmatpush.msra.mxu0 0.0
    %885 = vmatpush.msra.mxu0 %v92
    %886 = vmatpush.msra.mxu0 %v91
    %887 = vmatpush.msra.mxu0 %v90
    %888 = vmatpush.msra.mxu0 %v89
    %889 = vmatmul.f32.gmra.mxu0 %v871
    %v890 = vpop.f32.mrf.mxu0
    %v891 = vadd.f32 0.0, %v890
    %892 = vdwg.mxu0
    %v894 = vrot.slane %v891, 4
    %v896 = vadd.f32 %v87, %v894
    %v897 = vxor.u32 %v896, 2147483648
    %v898 = vmul.f32 %v897, 1.442695
    %v899 = vpow.pop %v898
    %v900 = vadd.f32 %v899, 1.0
    %v901 = vrcp.pop %v900
    %v902 = vmul.f32 %v900, %v901
    %v903 = vsub.f32 1.0, %v902
    %v904 = vmul.f32 %v901, %v903
    %v905 = vadd.f32 %v901, %v904
    %vm906 = vweird.f32 %v900
    %vm907 = vweird.f32 %v901
    %vm908 = vmor %vm906, %vm907
    %v909 = vsel %vm908, %v901, %v905
    %v910 = vand.u32 2147483647, %v900
    %vm911 = vcmp.eq.f32.partialorder %v910, 8.507059e+37
    %v912 = vand.u32 %v900, 2147483648
    %v913 = vor.u32 1.1754944e-38, %v912
    %v914 = vsel %vm911, %v913, %v909
    %v915 = vmul.f32 1.0, %v914
    %v916 = vtanh.pop %v896
    %v918 = vrot.slane %v794, 6
    %v920 = vmul.f32 %v915, %v918
    %922 = vrot.lane.b32.xlu0 %v916, 32
    %v923 = vpop.permute.xlu0 %922
    %v925 = vmul.f32 %v915, %v923
    %927 = vrot.lane.b32.xlu0 %v925, 32
    %v928 = vpop.permute.xlu0 %927
    %v930 = vadd.f32 %v920, %v928
    %v931 = vtanh.pop %v930
    %933 = vrot.lane.b32.xlu0 %v931, 32
    %v934 = vpop.permute.xlu0 %933
    %v936 = vmul.f32 %v915, %v934
    %937 = vrot.lane.b32.xlu0 %v800, 64
    %v938 = vpop.permute.xlu0 %937
    %v941 = vrot.slane %v866, 6
    %942 = vrot.lane.b32.xlu0 %v941, 96
    %v943 = vpop.permute.xlu0 %942
    %v945 = vsel %vm106, %v938, %v943
    %v947 = vrot.slane %v945, 2
    %v948 = vsel %vm250, %v947, 0
    %950 = vmatpush.msra.mxu0 0.0
    %951 = vmatpush.msra.mxu0 0.0
    %952 = vmatpush.msra.mxu0 0.0
    %953 = vmatpush.msra.mxu0 0.0
    %954 = vmatpush.msra.mxu0 0.0
    %955 = vmatpush.msra.mxu0 0.0
    %956 = vmatpush.msra.mxu0 0.0
    %957 = vmatpush.msra.mxu0 0.0
    %958 = vmatpush.msra.mxu0 %v100
    %959 = vmatpush.msra.mxu0 %v99
    %960 = vmatpush.msra.mxu0 %v98
    %961 = vmatpush.msra.mxu0 %v97
    %962 = vmatpush.msra.mxu0 %v96
    %963 = vmatpush.msra.mxu0 %v95
    %964 = vmatpush.msra.mxu0 %v94
    %965 = vmatpush.msra.mxu0 %v93
    %966 = vmatmul.f32.gmra.mxu0 %v948
    %v967 = vpop.f32.mrf.mxu0
    %v968 = vadd.f32 %v248, %v967
    %969 = vdwg.mxu0
    %v970 = vxor.u32 %v968, 2147483648
    %v971 = vmul.f32 %v970, 1.442695
    %v972 = vpow.pop %v971
    %v973 = vadd.f32 %v972, 1.0
    %v974 = vrcp.pop %v973
    %v975 = vmul.f32 %v973, %v974
    %v976 = vsub.f32 1.0, %v975
    %v977 = vmul.f32 %v974, %v976
    %v978 = vadd.f32 %v974, %v977
    %vm979 = vweird.f32 %v973
    %vm980 = vweird.f32 %v974
    %vm981 = vmor %vm979, %vm980
    %v982 = vsel %vm981, %v974, %v978
    %v983 = vand.u32 2147483647, %v973
    %vm984 = vcmp.eq.f32.partialorder %v983, 8.507059e+37
    %v985 = vand.u32 %v973, 2147483648
    %v986 = vor.u32 1.1754944e-38, %v985
    %v987 = vsel %vm984, %v986, %v982
    %v988 = vmul.f32 1.0, %v987
    %v989 = vtanh.pop %v968
    %v990 = vmul.f32 %v988, %v860
    %992 = vrot.lane.b32.xlu0 %v989, 32
    %v993 = vpop.permute.xlu0 %992
    %v995 = vmul.f32 %v988, %v993
    %997 = vrot.lane.b32.xlu0 %v995, 32
    %v998 = vpop.permute.xlu0 %997
    %v1000 = vadd.f32 %v990, %v998
    %v1001 = vtanh.pop %v1000
    %1003 = vrot.lane.b32.xlu0 %v1001, 32
    %v1004 = vpop.permute.xlu0 %1003
    %v1006 = vmul.f32 %v988, %v1004
    %v1008 = vrot.slane %v936, 4
    %1009 = vrot.lane.b32.xlu0 %v1008, 64
    %v1010 = vpop.permute.xlu0 %1009
    %v1011 = vsel %vm106, %v1010, 0
    %1013 = vmatpush.msra.mxu0 0.0
    %1014 = vmatpush.msra.mxu0 0.0
    %1015 = vmatpush.msra.mxu0 0.0
    %1016 = vmatpush.msra.mxu0 0.0
    %1017 = vmatpush.msra.mxu0 0.0
    %1018 = vmatpush.msra.mxu0 0.0
    %1019 = vmatpush.msra.mxu0 0.0
    %1020 = vmatpush.msra.mxu0 0.0
    %1021 = vmatpush.msra.mxu0 0.0
    %1022 = vmatpush.msra.mxu0 0.0
    %1023 = vmatpush.msra.mxu0 0.0
    %1024 = vmatpush.msra.mxu0 0.0
    %1025 = vmatpush.msra.mxu0 %v92
    %1026 = vmatpush.msra.mxu0 %v91
    %1027 = vmatpush.msra.mxu0 %v90
    %1028 = vmatpush.msra.mxu0 %v89
    %1029 = vmatmul.f32.gmra.mxu0 %v1011
    %v1030 = vpop.f32.mrf.mxu0
    %v1031 = vadd.f32 0.0, %v1030
    %1032 = vdwg.mxu0
    %v1034 = vrot.slane %v1031, 2
    %v1036 = vadd.f32 %v87, %v1034
    %v1037 = vxor.u32 %v1036, 2147483648
    %v1038 = vmul.f32 %v1037, 1.442695
    %v1039 = vpow.pop %v1038
    %v1040 = vadd.f32 %v1039, 1.0
    %v1041 = vrcp.pop %v1040
    %v1042 = vmul.f32 %v1040, %v1041
    %v1043 = vsub.f32 1.0, %v1042
    %v1044 = vmul.f32 %v1041, %v1043
    %v1045 = vadd.f32 %v1041, %v1044
    %vm1046 = vweird.f32 %v1040
    %vm1047 = vweird.f32 %v1041
    %vm1048 = vmor %vm1046, %vm1047
    %v1049 = vsel %vm1048, %v1041, %v1045
    %v1050 = vand.u32 2147483647, %v1040
    %vm1051 = vcmp.eq.f32.partialorder %v1050, 8.507059e+37
    %v1052 = vand.u32 %v1040, 2147483648
    %v1053 = vor.u32 1.1754944e-38, %v1052
    %v1054 = vsel %vm1051, %v1053, %v1049
    %v1055 = vmul.f32 1.0, %v1054
    %v1056 = vtanh.pop %v1036
    %v1058 = vrot.slane %v930, 6
    %v1060 = vmul.f32 %v1055, %v1058
    %1062 = vrot.lane.b32.xlu0 %v1056, 32
    %v1063 = vpop.permute.xlu0 %1062
    %v1065 = vmul.f32 %v1055, %v1063
    %1067 = vrot.lane.b32.xlu0 %v1065, 32
    %v1068 = vpop.permute.xlu0 %1067
    %v1070 = vadd.f32 %v1060, %v1068
    %v1071 = vtanh.pop %v1070
    %1073 = vrot.lane.b32.xlu0 %v1071, 32
    %v1074 = vpop.permute.xlu0 %1073
    %v1076 = vmul.f32 %v1055, %v1074
    %1077 = vrot.lane.b32.xlu0 %v936, 64
    %v1078 = vpop.permute.xlu0 %1077
    %v1081 = vrot.slane %v1006, 4
    %1082 = vrot.lane.b32.xlu0 %v1081, 96
    %v1083 = vpop.permute.xlu0 %1082
    %v1085 = vsel %vm106, %v1078, %v1083
    %v1087 = vrot.slane %v1085, 4
    %v1088 = vsel %vm250, %v1087, 0
    %1090 = vmatpush.msra.mxu0 0.0
    %1091 = vmatpush.msra.mxu0 0.0
    %1092 = vmatpush.msra.mxu0 0.0
    %1093 = vmatpush.msra.mxu0 0.0
    %1094 = vmatpush.msra.mxu0 0.0
    %1095 = vmatpush.msra.mxu0 0.0
    %1096 = vmatpush.msra.mxu0 0.0
    %1097 = vmatpush.msra.mxu0 0.0
    %1098 = vmatpush.msra.mxu0 %v100
    %1099 = vmatpush.msra.mxu0 %v99
    %1100 = vmatpush.msra.mxu0 %v98
    %1101 = vmatpush.msra.mxu0 %v97
    %1102 = vmatpush.msra.mxu0 %v96
    %1103 = vmatpush.msra.mxu0 %v95
    %1104 = vmatpush.msra.mxu0 %v94
    %1105 = vmatpush.msra.mxu0 %v93
    %1106 = vmatmul.f32.gmra.mxu0 %v1088
    %v1107 = vpop.f32.mrf.mxu0
    %v1108 = vadd.f32 %v248, %v1107
    %1109 = vdwg.mxu0
    %v1110 = vxor.u32 %v1108, 2147483648
    %v1111 = vmul.f32 %v1110, 1.442695
    %v1112 = vpow.pop %v1111
    %v1113 = vadd.f32 %v1112, 1.0
    %v1114 = vrcp.pop %v1113
    %v1115 = vmul.f32 %v1113, %v1114
    %v1116 = vsub.f32 1.0, %v1115
    %v1117 = vmul.f32 %v1114, %v1116
    %v1118 = vadd.f32 %v1114, %v1117
    %vm1119 = vweird.f32 %v1113
    %vm1120 = vweird.f32 %v1114
    %vm1121 = vmor %vm1119, %vm1120
    %v1122 = vsel %vm1121, %v1114, %v1118
    %v1123 = vand.u32 2147483647, %v1113
    %vm1124 = vcmp.eq.f32.partialorder %v1123, 8.507059e+37
    %v1125 = vand.u32 %v1113, 2147483648
    %v1126 = vor.u32 1.1754944e-38, %v1125
    %v1127 = vsel %vm1124, %v1126, %v1122
    %v1128 = vmul.f32 1.0, %v1127
    %v1129 = vtanh.pop %v1108
    %v1130 = vmul.f32 %v1128, %v1000
    %1132 = vrot.lane.b32.xlu0 %v1129, 32
    %v1133 = vpop.permute.xlu0 %1132
    %v1135 = vmul.f32 %v1128, %v1133
    %1137 = vrot.lane.b32.xlu0 %v1135, 32
    %v1138 = vpop.permute.xlu0 %1137
    %v1140 = vadd.f32 %v1130, %v1138
    %v1141 = vtanh.pop %v1140
    %1143 = vrot.lane.b32.xlu0 %v1141, 32
    %v1144 = vpop.permute.xlu0 %1143
    %v1146 = vmul.f32 %v1128, %v1144
    %1148 = vrot.lane.b32.xlu0 %v1076, 64
    %v1149 = vpop.permute.xlu0 %1148
    %v1152 = vrot.slane %v1146, 2
    %1153 = vrot.lane.b32.xlu0 %v1152, 96
    %v1154 = vpop.permute.xlu0 %1153
    %v1156 = vsel %vm106, %v1149, %v1154
    %v1158 = vrot.slane %v1156, 6
    %v1159 = vsel %vm250, %v1158, 0
    %1161 = vmatpush.msra.mxu0 0.0
    %1162 = vmatpush.msra.mxu0 0.0
    %1163 = vmatpush.msra.mxu0 0.0
    %1164 = vmatpush.msra.mxu0 0.0
    %1165 = vmatpush.msra.mxu0 0.0
    %1166 = vmatpush.msra.mxu0 0.0
    %1167 = vmatpush.msra.mxu0 0.0
    %1168 = vmatpush.msra.mxu0 0.0
    %1169 = vmatpush.msra.mxu0 %v100
    %1170 = vmatpush.msra.mxu0 %v99
    %1171 = vmatpush.msra.mxu0 %v98
    %1172 = vmatpush.msra.mxu0 %v97
    %1173 = vmatpush.msra.mxu0 %v96
    %1174 = vmatpush.msra.mxu0 %v95
    %1175 = vmatpush.msra.mxu0 %v94
    %1176 = vmatpush.msra.mxu0 %v93
    %1177 = vmatmul.f32.gmra.mxu0 %v1159
    %v1178 = vpop.f32.mrf.mxu0
    %v1179 = vadd.f32 %v248, %v1178
    %1180 = vdwg.mxu0
    %v1181 = vxor.u32 %v1179, 2147483648
    %v1182 = vmul.f32 %v1181, 1.442695
    %v1183 = vpow.pop %v1182
    %v1184 = vadd.f32 %v1183, 1.0
    %v1185 = vrcp.pop %v1184
    %v1186 = vmul.f32 %v1184, %v1185
    %v1187 = vsub.f32 1.0, %v1186
    %v1188 = vmul.f32 %v1185, %v1187
    %v1189 = vadd.f32 %v1185, %v1188
    %vm1190 = vweird.f32 %v1184
    %vm1191 = vweird.f32 %v1185
    %vm1192 = vmor %vm1190, %vm1191
    %v1193 = vsel %vm1192, %v1185, %v1189
    %v1194 = vand.u32 2147483647, %v1184
    %vm1195 = vcmp.eq.f32.partialorder %v1194, 8.507059e+37
    %v1196 = vand.u32 %v1184, 2147483648
    %v1197 = vor.u32 1.1754944e-38, %v1196
    %v1198 = vsel %vm1195, %v1197, %v1193
    %v1199 = vmul.f32 1.0, %v1198
    %v1200 = vtanh.pop %v1179
    %v1201 = vmul.f32 %v1199, %v1140
    %1203 = vrot.lane.b32.xlu0 %v1200, 32
    %v1204 = vpop.permute.xlu0 %1203
    %v1206 = vmul.f32 %v1199, %v1204
    %1208 = vrot.lane.b32.xlu0 %v1206, 32
    %v1209 = vpop.permute.xlu0 %1208
    %v1211 = vadd.f32 %v1201, %v1209
    %v1212 = vtanh.pop %v1211
    %1214 = vrot.lane.b32.xlu0 %v1212, 32
    %v1215 = vpop.permute.xlu0 %1214
    %v1217 = vmul.f32 %v1199, %v1215
    %v1218 = vld [vmem:[%s8] sm:$0xff]
    %v1219 = vld [vmem:[%s8 + $0x8] sm:$0xff]
    %v1220 = vld [vmem:[%s8 + $0x10] sm:$0xff]
    %v1221 = vld [vmem:[%s8 + $0x18] sm:$0xff]
    %v1222 = vld [vmem:[%s9] sm:$0x1]
    %v1224 = vperm.slane %v1222, 0
    %1227 = vrot.lane.b32.xlu0 %v1217, 64
    %v1228 = vpop.permute.xlu0 %1227
    %v1229 = vsel %vm106, %v1228, 0
    %1231 = vmatpush.msra.mxu0 0.0
    %1232 = vmatpush.msra.mxu0 0.0
    %1233 = vmatpush.msra.mxu0 0.0
    %1234 = vmatpush.msra.mxu0 0.0
    %1235 = vmatpush.msra.mxu0 0.0
    %1236 = vmatpush.msra.mxu0 0.0
    %1237 = vmatpush.msra.mxu0 0.0
    %1238 = vmatpush.msra.mxu0 0.0
    %1239 = vmatpush.msra.mxu0 0.0
    %1240 = vmatpush.msra.mxu0 0.0
    %1241 = vmatpush.msra.mxu0 0.0
    %1242 = vmatpush.msra.mxu0 0.0
    %1243 = vmatpush.msra.mxu0 %v1221
    %1244 = vmatpush.msra.mxu0 %v1220
    %1245 = vmatpush.msra.mxu0 %v1219
    %1246 = vmatpush.msra.mxu0 %v1218
    %1247 = vmatmul.f32.gmra.mxu0 %v1229
    %v1248 = vpop.f32.mrf.mxu0
    %v1249 = vadd.f32 %v1224, %v1248
    %1250 = vdwg.mxu0
    %v1251 = vxor.u32 %v1249, 2147483648
    %v1252 = vmul.f32 %v1251, 1.442695
    %v1253 = vpow.pop %v1252
    %v1254 = vadd.f32 %v1253, 1.0
    %v1255 = vrcp.pop %v1254
    %v1256 = vmul.f32 %v1254, %v1255
    %v1257 = vsub.f32 1.0, %v1256
    %v1258 = vmul.f32 %v1255, %v1257
    %v1259 = vadd.f32 %v1255, %v1258
    %vm1260 = vweird.f32 %v1254
    %vm1261 = vweird.f32 %v1255
    %vm1262 = vmor %vm1260, %vm1261
    %v1263 = vsel %vm1262, %v1255, %v1259
    %v1264 = vand.u32 2147483647, %v1254
    %vm1265 = vcmp.eq.f32.partialorder %v1264, 8.507059e+37
    %v1266 = vand.u32 %v1254, 2147483648
    %v1267 = vor.u32 1.1754944e-38, %v1266
    %v1268 = vsel %vm1265, %v1267, %v1263
    %v1269 = vmul.f32 1.0, %v1268
    %vm1270 = vcmask 25600
    %1271 = vst.msk [vmem:[#allocation5] sm:$0x3] %vm1270, %v1269
    // Predicated region
    $region46: #{tpu_custom_call.1} parent=1 // pred_check
      _
    $region47: #{tpu_custom_call.1} parent=1 // pred_check_branch
      %1273 = sbr.rel (0) target = $region49
    $region48: #{tpu_custom_call.1} parent=1 // pred_region
      %1275 = vsyncadd [#allocation4], 0
      %s1277 = sshll.u32 [#allocation5], 4
      %s1278 = int_to_ptr.vmem [resolvable:$true] %s1277
      %s1279 = sshll.u32 %s10, 4
      %s1280 = int_to_ptr.hbm [resolvable:$true] %s1279
      %1282 = dma.vmem_to_hbm [thread:$0]  %s1278, 32, %s1280, [#allocation4]
    $region49: #{tpu_custom_call.1} parent=1 // pred_fallthru
      _
    // Predicated region
    $region50: #{tpu_custom_call.1} parent=1 // pred_check
      _
    $region51: #{tpu_custom_call.1} parent=1 // pred_check_branch
      %1284 = sbr.rel (0) target = $region53
    $region52: #{tpu_custom_call.1} parent=1 // pred_region
      %1286 = dma.done [#allocation4], 32
    $region53: #{tpu_custom_call.1} parent=1 // pred_fallthru
      _
    %1287 = vsyncpa [#allocation3], 1
    %1288 = vsyncpa [#allocation4], 1

</llo_original>
